<compile_context>
chip_gen: v6e
topology: v6e:2x2x1
jax: 0.10.0
libtpu: 0.0.40
codegen_flags: <defaults>
</compile_context>

<pallas_src>
import functools

import jax
import jax.numpy as jnp
from jax import lax
from jax.experimental import pallas as pl
from jax.experimental.pallas import tpu as pltpu


# ----------------------------------------------------------------------------
# Pallas kernel: fully fused folding1 + folding2 MLP over a tile of samples
# ----------------------------------------------------------------------------

def _fold_kernel(seed_ref, wseed_ref, bv1_ref, bv2_ref,
                 w2a_ref, b2a_ref, wc_ref, w2b_ref, b2b_ref,
                 w3b_ref, b3b_ref, o_ref):
    # seed_ref : (2, TM)    f32  folding grid tile (channels on sublanes, samples on lanes)
    # wseed_ref: (2, H, 1)  f32  BN-folded seed columns of folding1's first conv
    # bv1_ref  : (1, H, 1)  f32  per-batch bias = BN-folded (W1a_feat @ x + b1a)
    # bv2_ref  : (1, H, 1)  f32  per-batch bias = BN-folded (W1b_feat @ x + b1b) + W1b_fd @ b3a
    # w2a/wc/w2b/w3b : bf16 weights;  b2a/b2b/b3b : f32 column-vector biases
    # o_ref    : (1, 3, TM) f32
    s = seed_ref[...]                                                       # (2, TM)

    # folding1 conv1 (+BN+ReLU): K=2, done on the VPU (MXU would pad K to a full tile).
    pre = wseed_ref[0] * s[0:1, :] + wseed_ref[1] * s[1:2, :] + bv1_ref[0]
    h1 = jnp.maximum(pre, 0.0).astype(jnp.bfloat16)                         # (H, TM)

    # folding1 conv2 (+BN+ReLU)
    h2 = jnp.dot(w2a_ref[...], h1, preferred_element_type=jnp.float32) + b2a_ref[...]
    h2 = jnp.maximum(h2, 0.0).astype(jnp.bfloat16)                          # (H2, TM)

    # folding1 conv3 fused with folding2 conv1 (+BN+ReLU).  Exact: no nonlinearity
    # between them, Wc = W1b_fd @ W3a precomputed in the wrapper; fd1 never exists.
    g1 = jnp.dot(wc_ref[...], h2, preferred_element_type=jnp.float32) + bv2_ref[0]
    g1 = jnp.maximum(g1, 0.0).astype(jnp.bfloat16)                          # (H, TM)

    # folding2 conv2 (+BN+ReLU)
    g2 = jnp.dot(w2b_ref[...], g1, preferred_element_type=jnp.float32) + b2b_ref[...]
    g2 = jnp.maximum(g2, 0.0).astype(jnp.bfloat16)                          # (H2, TM)

    # folding2 conv3
    o_ref[0] = jnp.dot(w3b_ref[...], g2, preferred_element_type=jnp.float32) + b3b_ref[...]


# ----------------------------------------------------------------------------
# Wrapper
# ----------------------------------------------------------------------------

def _folding_seed(step):
    lin = jnp.linspace(-1.0, 1.0, step, dtype=jnp.float32)
    a = jnp.broadcast_to(lin[None, :], (step, step)).reshape(1, -1)
    b = jnp.broadcast_to(lin[:, None], (step, step)).reshape(1, -1)
    return jnp.concatenate([a, b], axis=0)                                  # (2, step*step)


def _fold_bn(w, b, gamma, beta, mean, var, eps=1e-5):
    """Fold eval-mode BatchNorm1d into a preceding 1x1 conv (w: (Cout, Cin))."""
    scale = gamma * lax.rsqrt(var + eps)
    return w * scale[:, None], (b - mean) * scale + beta


def _tile_plan(M, B, max_tm=1024):
    """Largest lane-dense sample tile; guarantee >=2 grid steps (v7x has 2 TCs)."""
    mp0 = ((M + 127) // 128) * 128
    tm = min(mp0, max_tm)                     # multiple of 128, capped for v7x VMEM
    n = -(-mp0 // tm)
    if B * n < 2:
        n = 2                                 # split the sample axis so both cores work
    tm = ((-(-mp0 // n)) + 127) // 128 * 128  # rebalance tiles, keep lane-dense
    return tm, n * tm, n


def fold_forward(params, x, step, hidden_dim=512):
    """x: (B, in_channel)  ->  (B, 3, step*step)   (matches PyTorch Fold.forward, eval mode)."""
    B, _ = x.shape
    M = step * step
    H, H2 = hidden_dim, hidden_dim // 2
    f1, f2 = params["folding1"], params["folding2"]
    hi = lax.Precision.HIGHEST

    # Eval-mode BatchNorm folded into the convs.
    # TODO(synk): training-mode BatchNorm (batch statistics) is not implemented.
    w1a, b1a = _fold_bn(f1["w1"], f1["b1"], f1["g1"], f1["be1"], f1["m1"], f1["v1"])
    w2a, b2a = _fold_bn(f1["w2"], f1["b2"], f1["g2"], f1["be2"], f1["m2"], f1["v2"])
    w1b, b1b = _fold_bn(f2["w1"], f2["b1"], f2["g1"], f2["be1"], f2["m1"], f2["v1"])
    w2b, b2b = _fold_bn(f2["w2"], f2["b2"], f2["g2"], f2["be2"], f2["m2"], f2["v2"])
    w3a, b3a = f1["w3"], f1["b3"]
    w3b, b3b = f2["w3"], f2["b3"]

    # Split the first conv of each head: the broadcast feature half collapses to a
    # tiny per-batch bias vector (so (B, C, M) / concats never materialize in HBM).
    wseed = w1a[:, :2].T[:, :, None]                                # (2, H, 1)
    bv1 = jnp.dot(x, w1a[:, 2:].T, precision=hi) + b1a              # (B, H)

    # Fuse folding1.conv3 with folding2.conv1 (exact; no nonlinearity in between).
    w1b_fd = w1b[:, :3]                                             # (H, 3)
    wc = jnp.dot(w1b_fd, w3a, precision=hi)                         # (H, H2)
    bv2 = (jnp.dot(x, w1b[:, 3:].T, precision=hi) + b1b
           + jnp.dot(w1b_fd, b3a, precision=hi)[None, :])           # (B, H)

    # bf16 operands for the MXU (accumulation stays f32 inside the kernel).
    w2a_k = w2a.astype(jnp.bfloat16)
    wc_k = wc.astype(jnp.bfloat16)
    w2b_k = w2b.astype(jnp.bfloat16)
    w3b_k = w3b.astype(jnp.bfloat16)

    seed = _folding_seed(step)                                      # (2, M)
    TM, Mp, n_tiles = _tile_plan(M, B)
    if Mp != M:
        seed = jnp.pad(seed, ((0, 0), (0, Mp - M)))

    grid = (B, n_tiles)
    const2 = lambda bb, mm: (0, 0)

    inputs = (seed, wseed, bv1[:, :, None], bv2[:, :, None],
              w2a_k, b2a[:, None], wc_k, w2b_k, b2b[:, None],
              w3b_k, b3b[:, None])
    flops = 2 * B * Mp * (2 * H + H2 * H + H * H2 + H2 * H + 3 * H2)
    bytes_accessed = int(sum(a.size * a.dtype.itemsize for a in inputs)) + B * 3 * Mp * 4

    out = pl.pallas_call(
        _fold_kernel,
        out_shape=jax.ShapeDtypeStruct((B, 3, Mp), jnp.float32),
        grid=grid,
        in_specs=[
            pl.BlockSpec((2, TM), lambda bb, mm: (0, mm)),           # seed tile
            pl.BlockSpec((2, H, 1), lambda bb, mm: (0, 0, 0)),       # seed weight columns
            pl.BlockSpec((1, H, 1), lambda bb, mm: (bb, 0, 0)),      # per-batch bias (folding1)
            pl.BlockSpec((1, H, 1), lambda bb, mm: (bb, 0, 0)),      # per-batch bias (fused layer)
            pl.BlockSpec((H2, H), const2),                           # w2a (bf16)
            pl.BlockSpec((H2, 1), const2),                           # b2a
            pl.BlockSpec((H, H2), const2),                           # Wc  (bf16)
            pl.BlockSpec((H2, H), const2),                           # w2b (bf16)
            pl.BlockSpec((H2, 1), const2),                           # b2b
            pl.BlockSpec((3, H2), const2),                           # w3b (bf16)
            pl.BlockSpec((3, 1), const2),                            # b3b
        ],
        out_specs=pl.BlockSpec((1, 3, TM), lambda bb, mm: (bb, 0, mm)),
        compiler_params=pltpu.CompilerParams(
            dimension_semantics=("parallel", "parallel"),
            vmem_limit_bytes=48 * 1024 * 1024),
        cost_estimate=pl.CostEstimate(
            flops=flops, transcendentals=0, bytes_accessed=bytes_accessed),
    )(*inputs)

    return out[:, :, :M]


# ----------------------------------------------------------------------------
# Plain-JAX reference (eval-mode BN) and parameter init, for self-checking
# ----------------------------------------------------------------------------

def _fold_reference(params, x, step, hidden_dim=512, eps=1e-5):
    B, C = x.shape
    M = step * step
    seed = jnp.broadcast_to(_folding_seed(step)[None], (B, 2, M))
    features = jnp.broadcast_to(x[:, :, None], (B, C, M))

    def conv(w, b, z):
        return jnp.einsum("oc,bcm->bom", w, z,
                          precision=lax.Precision.HIGHEST) + b[None, :, None]

    def bn(g, be, m, v, z):
        return ((z - m[None, :, None]) * lax.rsqrt(v + eps)[None, :, None]
                * g[None, :, None] + be[None, :, None])

    def seq(p, z):
        z = jax.nn.relu(bn(p["g1"], p["be1"], p["m1"], p["v1"], conv(p["w1"], p["b1"], z)))
        z = jax.nn.relu(bn(p["g2"], p["be2"], p["m2"], p["v2"], conv(p["w2"], p["b2"], z)))
        return conv(p["w3"], p["b3"], z)

    fd1 = seq(params["folding1"], jnp.concatenate([seed, features], axis=1))
    return seq(params["folding2"], jnp.concatenate([fd1, features], axis=1))


def init_params(key, in_channel, hidden_dim=512):
    H, H2 = hidden_dim, hidden_dim // 2
    ks = iter(jax.random.split(key, 32))

    def w(shape, scale=0.1):
        return scale * jax.random.normal(next(ks), shape, jnp.float32)

    def bn_params(c):
        return {
            "g": 1.0 + 0.1 * jax.random.normal(next(ks), (c,), jnp.float32),
            "be": 0.1 * jax.random.normal(next(ks), (c,), jnp.float32),
            "m": 0.1 * jax.random.normal(next(ks), (c,), jnp.float32),
            "v": 0.5 + jax.random.uniform(next(ks), (c,), jnp.float32),
        }

    def folding(cin):
        bn1, bn2 = bn_params(H), bn_params(H2)
        return {
            "w1": w((H, cin)), "b1": w((H,)),
            "g1": bn1["g"], "be1": bn1["be"], "m1": bn1["m"], "v1": bn1["v"],
            "w2": w((H2, H)), "b2": w((H2,)),
            "g2": bn2["g"], "be2": bn2["be"], "m2": bn2["m"], "v2": bn2["v"],
            "w3": w((3, H2)), "b3": w((3,)),
        }

    return {"folding1": folding(in_channel + 2), "folding2": folding(in_channel + 3)}


if __name__ == "__main__":
    key = jax.random.PRNGKey(0)
    pkey, xkey = jax.random.split(key)

    # Small shapes: batch=2, in_channel=32, step=24 (576 samples -> one 640-wide lane tile), hidden=64.
    B, C, STEP, HID = 2, 32, 24, 64
    params = init_params(pkey, C, HID)
    x = jax.random.normal(xkey, (B, C), jnp.float32)

    fwd = jax.jit(functools.partial(fold_forward, step=STEP, hidden_dim=HID))
    out = jax.block_until_ready(fwd(params, x))

    assert out.shape == (B, 3, STEP * STEP), out.shape
    assert bool(jnp.all(jnp.isfinite(out)))

    ref = _fold_reference(params, x, STEP, HID)
    abs_err = float(jnp.max(jnp.abs(out - ref)))
    rel_err = float(jnp.linalg.norm(out - ref) / jnp.linalg.norm(ref))
    # bf16 MXU operands (f32 accumulation) vs. the f32 HIGHEST-precision reference.
    assert abs_err < 5e-2 and rel_err < 3e-2, (abs_err, rel_err)

    print("KERNEL_OK")
</pallas_src>

<mosaic_0001>
module attributes {stable_mosaic.version = 11 : i64} {
  func.func @_fold_kernel(%arg0: i32, %arg1: i32, %arg2: memref<2x640xf32, #tpu.memory_space<vmem>>, %arg3: memref<2x64x1xf32, #tpu.memory_space<vmem>>, %arg4: memref<1x64x1xf32, #tpu.memory_space<vmem>>, %arg5: memref<1x64x1xf32, #tpu.memory_space<vmem>>, %arg6: memref<32x64xbf16, #tpu.memory_space<vmem>>, %arg7: memref<32x1xf32, #tpu.memory_space<vmem>>, %arg8: memref<64x32xbf16, #tpu.memory_space<vmem>>, %arg9: memref<32x64xbf16, #tpu.memory_space<vmem>>, %arg10: memref<32x1xf32, #tpu.memory_space<vmem>>, %arg11: memref<3x32xbf16, #tpu.memory_space<vmem>>, %arg12: memref<3x1xf32, #tpu.memory_space<vmem>>, %arg13: memref<1x3x640xf32, #tpu.memory_space<vmem>>) attributes {dimension_semantics = [#tpu.dimension_semantics<parallel>, #tpu.dimension_semantics<parallel>], iteration_bounds = array<i64: 2, 1>, scalar_prefetch = 0 : i64, scratch_operands = 0 : i64, tpu.core_type = #tpu.core_type<tc>, window_params = [{transform_indices = @transform_0, window_bounds = array<i64: 2, 640>}, {pipeline_mode = #tpu.pipeline_mode<synchronous>, transform_indices = @transform_1, window_bounds = array<i64: 2, 64, 1>}, {transform_indices = @transform_2, window_bounds = array<i64: 1, 64, 1>}, {transform_indices = @transform_3, window_bounds = array<i64: 1, 64, 1>}, {pipeline_mode = #tpu.pipeline_mode<synchronous>, transform_indices = @transform_4, window_bounds = array<i64: 32, 64>}, {pipeline_mode = #tpu.pipeline_mode<synchronous>, transform_indices = @transform_5, window_bounds = array<i64: 32, 1>}, {pipeline_mode = #tpu.pipeline_mode<synchronous>, transform_indices = @transform_6, window_bounds = array<i64: 64, 32>}, {pipeline_mode = #tpu.pipeline_mode<synchronous>, transform_indices = @transform_7, window_bounds = array<i64: 32, 64>}, {pipeline_mode = #tpu.pipeline_mode<synchronous>, transform_indices = @transform_8, window_bounds = array<i64: 32, 1>}, {pipeline_mode = #tpu.pipeline_mode<synchronous>, transform_indices = @transform_9, window_bounds = array<i64: 3, 32>}, {pipeline_mode = #tpu.pipeline_mode<synchronous>, transform_indices = @transform_10, window_bounds = array<i64: 3, 1>}, {transform_indices = @transform_11, window_bounds = array<i64: 1, 3, 640>}]} {
    %c0 = arith.constant 0 : index
    %c0_0 = arith.constant 0 : index
    %0 = vector.load %arg2[%c0, %c0_0] : memref<2x640xf32, #tpu.memory_space<vmem>>, vector<2x640xf32>
    %c0_1 = arith.constant 0 : index
    %c0_2 = arith.constant 0 : index
    %c0_3 = arith.constant 0 : index
    %1 = vector.load %arg3[%c0_1, %c0_2, %c0_3] : memref<2x64x1xf32, #tpu.memory_space<vmem>>, vector<1x64x1xf32>
    %2 = vector.shape_cast %1 : vector<1x64x1xf32> to vector<64x1xf32>
    %3 = vector.extract_strided_slice %0 {offsets = [0, 0], sizes = [1, 640], strides = [1, 1]} : vector<2x640xf32> to vector<1x640xf32>
    %4 = vector.broadcast %2 : vector<64x1xf32> to vector<64x640xf32>
    %5 = vector.broadcast %3 : vector<1x640xf32> to vector<64x640xf32>
    %6 = arith.mulf %4, %5 : vector<64x640xf32>
    %c1 = arith.constant 1 : index
    %c0_4 = arith.constant 0 : index
    %c0_5 = arith.constant 0 : index
    %7 = vector.load %arg3[%c1, %c0_4, %c0_5] : memref<2x64x1xf32, #tpu.memory_space<vmem>>, vector<1x64x1xf32>
    %8 = vector.shape_cast %7 : vector<1x64x1xf32> to vector<64x1xf32>
    %9 = vector.extract_strided_slice %0 {offsets = [1, 0], sizes = [1, 640], strides = [1, 1]} : vector<2x640xf32> to vector<1x640xf32>
    %10 = vector.broadcast %8 : vector<64x1xf32> to vector<64x640xf32>
    %11 = vector.broadcast %9 : vector<1x640xf32> to vector<64x640xf32>
    %12 = arith.mulf %10, %11 : vector<64x640xf32>
    %13 = arith.addf %6, %12 : vector<64x640xf32>
    %c0_6 = arith.constant 0 : index
    %c0_7 = arith.constant 0 : index
    %c0_8 = arith.constant 0 : index
    %14 = vector.load %arg4[%c0_6, %c0_7, %c0_8] : memref<1x64x1xf32, #tpu.memory_space<vmem>>, vector<1x64x1xf32>
    %15 = vector.shape_cast %14 : vector<1x64x1xf32> to vector<64x1xf32>
    %16 = vector.broadcast %15 : vector<64x1xf32> to vector<64x640xf32>
    %17 = arith.addf %13, %16 : vector<64x640xf32>
    %cst = arith.constant 0.000000e+00 : f32
    %18 = vector.broadcast %cst : f32 to vector<64x640xf32>
    %19 = arith.maximumf %17, %18 : vector<64x640xf32>
    %20 = arith.truncf %19 : vector<64x640xf32> to vector<64x640xbf16>
    %c0_9 = arith.constant 0 : index
    %c0_10 = arith.constant 0 : index
    %21 = vector.load %arg6[%c0_9, %c0_10] : memref<32x64xbf16, #tpu.memory_space<vmem>>, vector<32x64xbf16>
    %cst_11 = arith.constant dense<0.000000e+00> : vector<32x640xf32>
    %22 = tpu.matmul %21, %20, %cst_11 {dimension_numbers = #tpu.dot_dimension_numbers<[1], [0], [0], [1], [0, 0, 1, 1], [], []>} : vector<32x64xbf16>, vector<64x640xbf16>, vector<32x640xf32> -> vector<32x640xf32>
    %c0_12 = arith.constant 0 : index
    %c0_13 = arith.constant 0 : index
    %23 = vector.load %arg7[%c0_12, %c0_13] : memref<32x1xf32, #tpu.memory_space<vmem>>, vector<32x1xf32>
    %24 = vector.broadcast %23 : vector<32x1xf32> to vector<32x640xf32>
    %25 = arith.addf %22, %24 : vector<32x640xf32>
    %cst_14 = arith.constant 0.000000e+00 : f32
    %26 = vector.broadcast %cst_14 : f32 to vector<32x640xf32>
    %27 = arith.maximumf %25, %26 : vector<32x640xf32>
    %28 = arith.truncf %27 : vector<32x640xf32> to vector<32x640xbf16>
    %c0_15 = arith.constant 0 : index
    %c0_16 = arith.constant 0 : index
    %29 = vector.load %arg8[%c0_15, %c0_16] : memref<64x32xbf16, #tpu.memory_space<vmem>>, vector<64x32xbf16>
    %cst_17 = arith.constant dense<0.000000e+00> : vector<64x640xf32>
    %30 = tpu.matmul %29, %28, %cst_17 {dimension_numbers = #tpu.dot_dimension_numbers<[1], [0], [0], [1], [0, 0, 1, 1], [], []>} : vector<64x32xbf16>, vector<32x640xbf16>, vector<64x640xf32> -> vector<64x640xf32>
    %c0_18 = arith.constant 0 : index
    %c0_19 = arith.constant 0 : index
    %c0_20 = arith.constant 0 : index
    %31 = vector.load %arg5[%c0_18, %c0_19, %c0_20] : memref<1x64x1xf32, #tpu.memory_space<vmem>>, vector<1x64x1xf32>
    %32 = vector.shape_cast %31 : vector<1x64x1xf32> to vector<64x1xf32>
    %33 = vector.broadcast %32 : vector<64x1xf32> to vector<64x640xf32>
    %34 = arith.addf %30, %33 : vector<64x640xf32>
    %cst_21 = arith.constant 0.000000e+00 : f32
    %35 = vector.broadcast %cst_21 : f32 to vector<64x640xf32>
    %36 = arith.maximumf %34, %35 : vector<64x640xf32>
    %37 = arith.truncf %36 : vector<64x640xf32> to vector<64x640xbf16>
    %c0_22 = arith.constant 0 : index
    %c0_23 = arith.constant 0 : index
    %38 = vector.load %arg9[%c0_22, %c0_23] : memref<32x64xbf16, #tpu.memory_space<vmem>>, vector<32x64xbf16>
    %cst_24 = arith.constant dense<0.000000e+00> : vector<32x640xf32>
    %39 = tpu.matmul %38, %37, %cst_24 {dimension_numbers = #tpu.dot_dimension_numbers<[1], [0], [0], [1], [0, 0, 1, 1], [], []>} : vector<32x64xbf16>, vector<64x640xbf16>, vector<32x640xf32> -> vector<32x640xf32>
    %c0_25 = arith.constant 0 : index
    %c0_26 = arith.constant 0 : index
    %40 = vector.load %arg10[%c0_25, %c0_26] : memref<32x1xf32, #tpu.memory_space<vmem>>, vector<32x1xf32>
    %41 = vector.broadcast %40 : vector<32x1xf32> to vector<32x640xf32>
    %42 = arith.addf %39, %41 : vector<32x640xf32>
    %cst_27 = arith.constant 0.000000e+00 : f32
    %43 = vector.broadcast %cst_27 : f32 to vector<32x640xf32>
    %44 = arith.maximumf %42, %43 : vector<32x640xf32>
    %45 = arith.truncf %44 : vector<32x640xf32> to vector<32x640xbf16>
    %c0_28 = arith.constant 0 : index
    %c0_29 = arith.constant 0 : index
    %46 = vector.load %arg11[%c0_28, %c0_29] : memref<3x32xbf16, #tpu.memory_space<vmem>>, vector<3x32xbf16>
    %cst_30 = arith.constant dense<0.000000e+00> : vector<3x640xf32>
    %47 = tpu.matmul %46, %45, %cst_30 {dimension_numbers = #tpu.dot_dimension_numbers<[1], [0], [0], [1], [0, 0, 1, 1], [], []>} : vector<3x32xbf16>, vector<32x640xbf16>, vector<3x640xf32> -> vector<3x640xf32>
    %c0_31 = arith.constant 0 : index
    %c0_32 = arith.constant 0 : index
    %48 = vector.load %arg12[%c0_31, %c0_32] : memref<3x1xf32, #tpu.memory_space<vmem>>, vector<3x1xf32>
    %49 = vector.broadcast %48 : vector<3x1xf32> to vector<3x640xf32>
    %50 = arith.addf %47, %49 : vector<3x640xf32>
    %c0_33 = arith.constant 0 : index
    %c0_34 = arith.constant 0 : index
    %c0_35 = arith.constant 0 : index
    %51 = vector.load %arg13[%c0_33, %c0_34, %c0_35] : memref<1x3x640xf32, #tpu.memory_space<vmem>>, vector<1x3x640xf32>
    %52 = vector.shape_cast %51 : vector<1x3x640xf32> to vector<3x640xf32>
    %53 = vector.shape_cast %50 : vector<3x640xf32> to vector<1x3x640xf32>
    tpu.vector_store %arg13[%c0_33, %c0_34, %c0_35], %53 {strides = array<i32>} : memref<1x3x640xf32, #tpu.memory_space<vmem>>, vector<1x3x640xf32>,
    return
  }
  func.func @transform_0(%arg0: i32, %arg1: i32) -> (i32, i32) {
    %c0_i32 = arith.constant 0 : i32
    %c0_i32_0 = arith.constant 0 : i32
    return %c0_i32, %arg1 : i32, i32
  }
  func.func @transform_1(%arg0: i32, %arg1: i32) -> (i32, i32, i32) {
    %c0_i32 = arith.constant 0 : i32
    %c0_i32_0 = arith.constant 0 : i32
    %c0_i32_1 = arith.constant 0 : i32
    %c0_i32_2 = arith.constant 0 : i32
    return %c0_i32, %c0_i32_0, %c0_i32_1 : i32, i32, i32
  }
  func.func @transform_2(%arg0: i32, %arg1: i32) -> (i32, i32, i32) {
    %c0_i32 = arith.constant 0 : i32
    %c0_i32_0 = arith.constant 0 : i32
    %c0_i32_1 = arith.constant 0 : i32
    return %arg0, %c0_i32, %c0_i32_0 : i32, i32, i32
  }
  func.func @transform_3(%arg0: i32, %arg1: i32) -> (i32, i32, i32) {
    %c0_i32 = arith.constant 0 : i32
    %c0_i32_0 = arith.constant 0 : i32
    %c0_i32_1 = arith.constant 0 : i32
    return %arg0, %c0_i32, %c0_i32_0 : i32, i32, i32
  }
  func.func @transform_4(%arg0: i32, %arg1: i32) -> (i32, i32) {
    %c0_i32 = arith.constant 0 : i32
    %c0_i32_0 = arith.constant 0 : i32
    %c0_i32_1 = arith.constant 0 : i32
    return %c0_i32, %c0_i32_0 : i32, i32
  }
  func.func @transform_5(%arg0: i32, %arg1: i32) -> (i32, i32) {
    %c0_i32 = arith.constant 0 : i32
    %c0_i32_0 = arith.constant 0 : i32
    %c0_i32_1 = arith.constant 0 : i32
    return %c0_i32, %c0_i32_0 : i32, i32
  }
  func.func @transform_6(%arg0: i32, %arg1: i32) -> (i32, i32) {
    %c0_i32 = arith.constant 0 : i32
    %c0_i32_0 = arith.constant 0 : i32
    %c0_i32_1 = arith.constant 0 : i32
    return %c0_i32, %c0_i32_0 : i32, i32
  }
  func.func @transform_7(%arg0: i32, %arg1: i32) -> (i32, i32) {
    %c0_i32 = arith.constant 0 : i32
    %c0_i32_0 = arith.constant 0 : i32
    %c0_i32_1 = arith.constant 0 : i32
    return %c0_i32, %c0_i32_0 : i32, i32
  }
  func.func @transform_8(%arg0: i32, %arg1: i32) -> (i32, i32) {
    %c0_i32 = arith.constant 0 : i32
    %c0_i32_0 = arith.constant 0 : i32
    %c0_i32_1 = arith.constant 0 : i32
    return %c0_i32, %c0_i32_0 : i32, i32
  }
  func.func @transform_9(%arg0: i32, %arg1: i32) -> (i32, i32) {
    %c0_i32 = arith.constant 0 : i32
    %c0_i32_0 = arith.constant 0 : i32
    %c0_i32_1 = arith.constant 0 : i32
    return %c0_i32, %c0_i32_0 : i32, i32
  }
  func.func @transform_10(%arg0: i32, %arg1: i32) -> (i32, i32) {
    %c0_i32 = arith.constant 0 : i32
    %c0_i32_0 = arith.constant 0 : i32
    %c0_i32_1 = arith.constant 0 : i32
    return %c0_i32, %c0_i32_0 : i32, i32
  }
  func.func @transform_11(%arg0: i32, %arg1: i32) -> (i32, i32, i32) {
    %c0_i32 = arith.constant 0 : i32
    %c0_i32_0 = arith.constant 0 : i32
    return %arg0, %c0_i32, %arg1 : i32, i32, i32
  }
}

</mosaic_0001>

<llo_original>
// kernel: fold_forward.1
$region0: #{fold_forward.1}
  #allocation0 [shape = 'u32[]', space=smem, size = 0x4, offset = 0x4, fixed_abs, tag = 'smem constant byte address 0x4 - core index']
  #allocation1 [shape = 'u32[144,128]{1,0:T(1,128)}', space=vmem, size = 0x12000, scoped, tag = 'internal scratch']
  %s0 = inlined_call_operand.vmem [shape: f32[2,640], index: 0, kind: input, shape index: {}]
  %s1 = inlined_call_operand.vmem [shape: f32[2,64,1], index: 1, kind: input, shape index: {}]
  %s2 = inlined_call_operand.vmem [shape: f32[2,64,1], index: 2, kind: input, shape index: {}]
  %s3 = inlined_call_operand.vmem [shape: f32[2,64,1], index: 3, kind: input, shape index: {}]
  %s4 = inlined_call_operand.vmem [shape: bf16[32,64], index: 4, kind: input, shape index: {}]
  %s5 = inlined_call_operand.vmem [shape: f32[32,1], index: 5, kind: input, shape index: {}]
  %s6 = inlined_call_operand.vmem [shape: bf16[64,32], index: 6, kind: input, shape index: {}]
  %s7 = inlined_call_operand.vmem [shape: bf16[32,64], index: 7, kind: input, shape index: {}]
  %s8 = inlined_call_operand.vmem [shape: f32[32,1], index: 8, kind: input, shape index: {}]
  %s9 = inlined_call_operand.vmem [shape: bf16[3,32], index: 9, kind: input, shape index: {}]
  %s10 = inlined_call_operand.vmem [shape: f32[3,1], index: 10, kind: input, shape index: {}]
  %s11 = inlined_call_operand.vmem [shape: f32[2,3,640], index: 11, kind: output, shape index: {}]
  %s12 = sld [smem:[#allocation0]]
  $region77: #{fold_forward.1} parent=0
    _
  %s14 = ssub.s32 1, %s12
  %s15 = scalar_select 0, %s14, %s12
  loop: start=0, step=1, limit=4
  $region2: #{fold_forward.1} parent=0 // loop_pre_header
    _
  $region3: #{fold_forward.1} parent=0 // loop_header
    %s17 = sphi 0, %s21
    %p18 = scmp.ge.s32.totalorder %s17, 4
    %s24 = sphi 0, %s36
    %s25 = sphi 0, %s32
    %s26 = sphi 0, %s24
    %s27 = sphi 0, %s25
    %s28 = sphi 0, %s26
    %s29 = sphi 0, %s27
    %s39 = sphi 0, %s41
    %s42 = sphi 0, %s39
    %s43 = sphi 0, %s42
    %s59 = sphi 0, %s43
    %s63 = sphi 0, %s63
    %s65 = sphi 0, %s63
    %s66 = sphi 0, %s65
    %s80 = sphi 0, %s66
    %s86 = sphi 0, %s88
    %s89 = sphi 0, %s86
    %s90 = sphi 0, %s89
    %s106 = sphi 0, %s90
    %s112 = sphi 0, %s114
    %s115 = sphi 0, %s112
    %s116 = sphi 0, %s115
    %s132 = sphi 0, %s116
    %s136 = sphi 0, %s136
    %s138 = sphi 0, %s136
    %s139 = sphi 0, %s138
    %s153 = sphi 0, %s139
    %s157 = sphi 0, %s157
    %s159 = sphi 0, %s157
    %s160 = sphi 0, %s159
    %s174 = sphi 0, %s160
    %s178 = sphi 0, %s178
    %s180 = sphi 0, %s178
    %s181 = sphi 0, %s180
    %s195 = sphi 0, %s181
    %s199 = sphi 0, %s199
    %s201 = sphi 0, %s199
    %s202 = sphi 0, %s201
    %s216 = sphi 0, %s202
    %s220 = sphi 0, %s220
    %s222 = sphi 0, %s220
    %s223 = sphi 0, %s222
    %s237 = sphi 0, %s223
    %s241 = sphi 0, %s241
    %s243 = sphi 0, %s241
    %s244 = sphi 0, %s243
    %s258 = sphi 0, %s244
    %s262 = sphi 0, %s262
    %s264 = sphi 0, %s262
    %s265 = sphi 0, %s264
    %s279 = sphi 0, %s265
    %s287 = sphi 0, %s289
    %s290 = sphi 0, %s287
    %s291 = sphi 0, %s290
    %s307 = sphi 0, %s291
  $region4: #{fold_forward.1} parent=0 // loop_header_branch
    %20 = sbr.rel (%p18) target = $region8
  $region5: #{fold_forward.1} parent=0 // loop_body
    %s22 = ssub.s32 %s17, 1
    %s23 = ssub.s32 %s17, 2
    %s30 = sadd.s32 1, %s25
    %p31 = scmp.ge.s32.totalorder %s30, 1
    %s32 = scalar_select %p31, 0, %s30
    %s33 = sadd.s32 1, %s24
    %s34 = scalar_select %p31, %s33, %s24
    %p35 = scmp.ge.s32.totalorder %s34, 2
    %s36 = scalar_select %p35, 0, %s34
    %s37 = ssub.s32 %s25, %s32
    %p38 = scmp.eq.s32.totalorder %s37, 0
    %s40 = sadd.s32 %s39, 1
    %s41 = scalar_select %p38, %s39, %s40
    %p44 = pneg %p38
    %p45 = scmp.eq.s32.totalorder %s17, 1
    %p46 = por %p44, %p45
    %p47 = scmp.ne.s32.totalorder %s39, %s42
    %p48 = scmp.eq.s32.totalorder %s17, 0
    %p49 = por %p47, %p48
    %p50 = scmp.ne.s32.totalorder %s39, %s42
    %p51 = scmp.eq.s32.totalorder %s22, 1
    %p52 = por %p50, %p51
    %p53 = scmp.ne.s32.totalorder %s42, %s43
    %p54 = scmp.eq.s32.totalorder %s22, 0
    %p55 = por %p53, %p54
    %p56 = scmp.ne.s32.totalorder %s42, %s43
    %p57 = scmp.eq.s32.totalorder %s23, 1
    %p58 = por %p56, %p57
    %p60 = scmp.ne.s32.totalorder %s43, %s59
    %p61 = scmp.eq.s32.totalorder %s23, 0
    %p62 = por %p60, %p61
    %s64 = sadd.s32 %s63, 1
    %p67 = scmp.eq.s32.totalorder %s17, 1
    %p68 = scmp.ne.s32.totalorder %s63, %s65
    %p69 = scmp.eq.s32.totalorder %s17, 0
    %p70 = por %p68, %p69
    %p71 = scmp.ne.s32.totalorder %s63, %s65
    %p72 = scmp.eq.s32.totalorder %s22, 1
    %p73 = por %p71, %p72
    %p74 = scmp.ne.s32.totalorder %s65, %s66
    %p75 = scmp.eq.s32.totalorder %s22, 0
    %p76 = por %p74, %p75
    %p77 = scmp.ne.s32.totalorder %s65, %s66
    %p78 = scmp.eq.s32.totalorder %s23, 1
    %p79 = por %p77, %p78
    %p81 = scmp.ne.s32.totalorder %s66, %s80
    %p82 = scmp.eq.s32.totalorder %s23, 0
    %p83 = por %p81, %p82
    %s84 = ssub.s32 %s24, %s36
    %p85 = scmp.eq.s32.totalorder %s84, 0
    %s87 = sadd.s32 %s86, 1
    %s88 = scalar_select %p85, %s86, %s87
    %p91 = pneg %p85
    %p92 = scmp.eq.s32.totalorder %s17, 1
    %p93 = por %p91, %p92
    %p94 = scmp.ne.s32.totalorder %s86, %s89
    %p95 = scmp.eq.s32.totalorder %s17, 0
    %p96 = por %p94, %p95
    %p97 = scmp.ne.s32.totalorder %s86, %s89
    %p98 = scmp.eq.s32.totalorder %s22, 1
    %p99 = por %p97, %p98
    %p100 = scmp.ne.s32.totalorder %s89, %s90
    %p101 = scmp.eq.s32.totalorder %s22, 0
    %p102 = por %p100, %p101
    %p103 = scmp.ne.s32.totalorder %s89, %s90
    %p104 = scmp.eq.s32.totalorder %s23, 1
    %p105 = por %p103, %p104
    %p107 = scmp.ne.s32.totalorder %s90, %s106
    %p108 = scmp.eq.s32.totalorder %s23, 0
    %p109 = por %p107, %p108
    %s110 = ssub.s32 %s24, %s36
    %p111 = scmp.eq.s32.totalorder %s110, 0
    %s113 = sadd.s32 %s112, 1
    %s114 = scalar_select %p111, %s112, %s113
    %p117 = pneg %p111
    %p118 = scmp.eq.s32.totalorder %s17, 1
    %p119 = por %p117, %p118
    %p120 = scmp.ne.s32.totalorder %s112, %s115
    %p121 = scmp.eq.s32.totalorder %s17, 0
    %p122 = por %p120, %p121
    %p123 = scmp.ne.s32.totalorder %s112, %s115
    %p124 = scmp.eq.s32.totalorder %s22, 1
    %p125 = por %p123, %p124
    %p126 = scmp.ne.s32.totalorder %s115, %s116
    %p127 = scmp.eq.s32.totalorder %s22, 0
    %p128 = por %p126, %p127
    %p129 = scmp.ne.s32.totalorder %s115, %s116
    %p130 = scmp.eq.s32.totalorder %s23, 1
    %p131 = por %p129, %p130
    %p133 = scmp.ne.s32.totalorder %s116, %s132
    %p134 = scmp.eq.s32.totalorder %s23, 0
    %p135 = por %p133, %p134
    %s137 = sadd.s32 %s136, 1
    %p140 = scmp.eq.s32.totalorder %s17, 1
    %p141 = scmp.ne.s32.totalorder %s136, %s138
    %p142 = scmp.eq.s32.totalorder %s17, 0
    %p143 = por %p141, %p142
    %p144 = scmp.ne.s32.totalorder %s136, %s138
    %p145 = scmp.eq.s32.totalorder %s22, 1
    %p146 = por %p144, %p145
    %p147 = scmp.ne.s32.totalorder %s138, %s139
    %p148 = scmp.eq.s32.totalorder %s22, 0
    %p149 = por %p147, %p148
    %p150 = scmp.ne.s32.totalorder %s138, %s139
    %p151 = scmp.eq.s32.totalorder %s23, 1
    %p152 = por %p150, %p151
    %p154 = scmp.ne.s32.totalorder %s139, %s153
    %p155 = scmp.eq.s32.totalorder %s23, 0
    %p156 = por %p154, %p155
    %s158 = sadd.s32 %s157, 1
    %p161 = scmp.eq.s32.totalorder %s17, 1
    %p162 = scmp.ne.s32.totalorder %s157, %s159
    %p163 = scmp.eq.s32.totalorder %s17, 0
    %p164 = por %p162, %p163
    %p165 = scmp.ne.s32.totalorder %s157, %s159
    %p166 = scmp.eq.s32.totalorder %s22, 1
    %p167 = por %p165, %p166
    %p168 = scmp.ne.s32.totalorder %s159, %s160
    %p169 = scmp.eq.s32.totalorder %s22, 0
    %p170 = por %p168, %p169
    %p171 = scmp.ne.s32.totalorder %s159, %s160
    %p172 = scmp.eq.s32.totalorder %s23, 1
    %p173 = por %p171, %p172
    %p175 = scmp.ne.s32.totalorder %s160, %s174
    %p176 = scmp.eq.s32.totalorder %s23, 0
    %p177 = por %p175, %p176
    %s179 = sadd.s32 %s178, 1
    %p182 = scmp.eq.s32.totalorder %s17, 1
    %p183 = scmp.ne.s32.totalorder %s178, %s180
    %p184 = scmp.eq.s32.totalorder %s17, 0
    %p185 = por %p183, %p184
    %p186 = scmp.ne.s32.totalorder %s178, %s180
    %p187 = scmp.eq.s32.totalorder %s22, 1
    %p188 = por %p186, %p187
    %p189 = scmp.ne.s32.totalorder %s180, %s181
    %p190 = scmp.eq.s32.totalorder %s22, 0
    %p191 = por %p189, %p190
    %p192 = scmp.ne.s32.totalorder %s180, %s181
    %p193 = scmp.eq.s32.totalorder %s23, 1
    %p194 = por %p192, %p193
    %p196 = scmp.ne.s32.totalorder %s181, %s195
    %p197 = scmp.eq.s32.totalorder %s23, 0
    %p198 = por %p196, %p197
    %s200 = sadd.s32 %s199, 1
    %p203 = scmp.eq.s32.totalorder %s17, 1
    %p204 = scmp.ne.s32.totalorder %s199, %s201
    %p205 = scmp.eq.s32.totalorder %s17, 0
    %p206 = por %p204, %p205
    %p207 = scmp.ne.s32.totalorder %s199, %s201
    %p208 = scmp.eq.s32.totalorder %s22, 1
    %p209 = por %p207, %p208
    %p210 = scmp.ne.s32.totalorder %s201, %s202
    %p211 = scmp.eq.s32.totalorder %s22, 0
    %p212 = por %p210, %p211
    %p213 = scmp.ne.s32.totalorder %s201, %s202
    %p214 = scmp.eq.s32.totalorder %s23, 1
    %p215 = por %p213, %p214
    %p217 = scmp.ne.s32.totalorder %s202, %s216
    %p218 = scmp.eq.s32.totalorder %s23, 0
    %p219 = por %p217, %p218
    %s221 = sadd.s32 %s220, 1
    %p224 = scmp.eq.s32.totalorder %s17, 1
    %p225 = scmp.ne.s32.totalorder %s220, %s222
    %p226 = scmp.eq.s32.totalorder %s17, 0
    %p227 = por %p225, %p226
    %p228 = scmp.ne.s32.totalorder %s220, %s222
    %p229 = scmp.eq.s32.totalorder %s22, 1
    %p230 = por %p228, %p229
    %p231 = scmp.ne.s32.totalorder %s222, %s223
    %p232 = scmp.eq.s32.totalorder %s22, 0
    %p233 = por %p231, %p232
    %p234 = scmp.ne.s32.totalorder %s222, %s223
    %p235 = scmp.eq.s32.totalorder %s23, 1
    %p236 = por %p234, %p235
    %p238 = scmp.ne.s32.totalorder %s223, %s237
    %p239 = scmp.eq.s32.totalorder %s23, 0
    %p240 = por %p238, %p239
    %s242 = sadd.s32 %s241, 1
    %p245 = scmp.eq.s32.totalorder %s17, 1
    %p246 = scmp.ne.s32.totalorder %s241, %s243
    %p247 = scmp.eq.s32.totalorder %s17, 0
    %p248 = por %p246, %p247
    %p249 = scmp.ne.s32.totalorder %s241, %s243
    %p250 = scmp.eq.s32.totalorder %s22, 1
    %p251 = por %p249, %p250
    %p252 = scmp.ne.s32.totalorder %s243, %s244
    %p253 = scmp.eq.s32.totalorder %s22, 0
    %p254 = por %p252, %p253
    %p255 = scmp.ne.s32.totalorder %s243, %s244
    %p256 = scmp.eq.s32.totalorder %s23, 1
    %p257 = por %p255, %p256
    %p259 = scmp.ne.s32.totalorder %s244, %s258
    %p260 = scmp.eq.s32.totalorder %s23, 0
    %p261 = por %p259, %p260
    %s263 = sadd.s32 %s262, 1
    %p266 = scmp.eq.s32.totalorder %s17, 1
    %p267 = scmp.ne.s32.totalorder %s262, %s264
    %p268 = scmp.eq.s32.totalorder %s17, 0
    %p269 = por %p267, %p268
    %p270 = scmp.ne.s32.totalorder %s262, %s264
    %p271 = scmp.eq.s32.totalorder %s22, 1
    %p272 = por %p270, %p271
    %p273 = scmp.ne.s32.totalorder %s264, %s265
    %p274 = scmp.eq.s32.totalorder %s22, 0
    %p275 = por %p273, %p274
    %p276 = scmp.ne.s32.totalorder %s264, %s265
    %p277 = scmp.eq.s32.totalorder %s23, 1
    %p278 = por %p276, %p277
    %p280 = scmp.ne.s32.totalorder %s265, %s279
    %p281 = scmp.eq.s32.totalorder %s23, 0
    %p282 = por %p280, %p281
    %s283 = ssub.s32 %s24, %s36
    %s284 = ssub.s32 %s25, %s32
    %s285 = sor.u32 %s283, %s284
    %p286 = scmp.eq.s32.totalorder %s285, 0
    %s288 = sadd.s32 %s287, 1
    %s289 = scalar_select %p286, %s287, %s288
    %p292 = pneg %p286
    %p293 = scmp.eq.s32.totalorder %s17, 1
    %p294 = por %p292, %p293
    %p295 = scmp.ne.s32.totalorder %s287, %s290
    %p296 = scmp.eq.s32.totalorder %s17, 0
    %p297 = por %p295, %p296
    %p298 = scmp.ne.s32.totalorder %s287, %s290
    %p299 = scmp.eq.s32.totalorder %s22, 1
    %p300 = por %p298, %p299
    %p301 = scmp.ne.s32.totalorder %s290, %s291
    %p302 = scmp.eq.s32.totalorder %s22, 0
    %p303 = por %p301, %p302
    %p304 = scmp.ne.s32.totalorder %s290, %s291
    %p305 = scmp.eq.s32.totalorder %s23, 1
    %p306 = por %p304, %p305
    %p308 = scmp.ne.s32.totalorder %s291, %s307
    %p309 = scmp.eq.s32.totalorder %s23, 0
    %p310 = por %p308, %p309
    %p311 = scmp.le.s32.totalorder 1, %s17
    %p312 = scmp.lt.s32.totalorder %s17, 3
    %p313 = pnand %p311, %p312
    %p314 = pneg %p313
    // Predicated region
    $region9: #{fold_forward.1} parent=5 // pred_check
      _
    $region10: #{fold_forward.1} parent=5 // pred_check_branch
      %316 = sbr.rel (%p313) target = $region12
    $region11: #{fold_forward.1} parent=5 // pred_region
      %s317 = ssub.s32 %s17, 1
      // Predicated region
      $region13: #{fold_forward.1} parent=11 // pred_check
        %p318 = pneg %p55
      $region14: #{fold_forward.1} parent=11 // pred_check_branch
        %320 = sbr.rel (%p318) target = $region16
      $region15: #{fold_forward.1} parent=11 // pred_region
        %s321 = smul.u32 5, %s27
        %p322 = scmp.lt.s32.totalorder %s321, 4
        %s323 = scalar_select %p322, %s321, 4
        %s324 = smul.addr %s323, 2
        %s325 = scalar_lea.vmem %s0, %s324
        %s326 = smul.u32 5, %s27
      $region16: #{fold_forward.1} parent=11 // pred_fallthru
        _
      // Predicated region
      $region17: #{fold_forward.1} parent=11 // pred_check
        %p327 = pneg %p76
      $region18: #{fold_forward.1} parent=11 // pred_check_branch
        %329 = sbr.rel (%p327) target = $region20
      $region19: #{fold_forward.1} parent=11 // pred_region
        _
      $region20: #{fold_forward.1} parent=11 // pred_fallthru
        _
      // Predicated region
      $region21: #{fold_forward.1} parent=11 // pred_check
        %p330 = pneg %p149
      $region22: #{fold_forward.1} parent=11 // pred_check_branch
        %332 = sbr.rel (%p330) target = $region24
      $region23: #{fold_forward.1} parent=11 // pred_region
        _
      $region24: #{fold_forward.1} parent=11 // pred_fallthru
        _
      // Predicated region
      $region25: #{fold_forward.1} parent=11 // pred_check
        %p333 = pneg %p170
      $region26: #{fold_forward.1} parent=11 // pred_check_branch
        %335 = sbr.rel (%p333) target = $region28
      $region27: #{fold_forward.1} parent=11 // pred_region
        _
      $region28: #{fold_forward.1} parent=11 // pred_fallthru
        _
      // Predicated region
      $region29: #{fold_forward.1} parent=11 // pred_check
        %p336 = pneg %p191
      $region30: #{fold_forward.1} parent=11 // pred_check_branch
        %338 = sbr.rel (%p336) target = $region32
      $region31: #{fold_forward.1} parent=11 // pred_region
        _
      $region32: #{fold_forward.1} parent=11 // pred_fallthru
        _
      // Predicated region
      $region33: #{fold_forward.1} parent=11 // pred_check
        %p339 = pneg %p212
      $region34: #{fold_forward.1} parent=11 // pred_check_branch
        %341 = sbr.rel (%p339) target = $region36
      $region35: #{fold_forward.1} parent=11 // pred_region
        _
      $region36: #{fold_forward.1} parent=11 // pred_fallthru
        _
      // Predicated region
      $region37: #{fold_forward.1} parent=11 // pred_check
        %p342 = pneg %p233
      $region38: #{fold_forward.1} parent=11 // pred_check_branch
        %344 = sbr.rel (%p342) target = $region40
      $region39: #{fold_forward.1} parent=11 // pred_region
        _
      $region40: #{fold_forward.1} parent=11 // pred_fallthru
        _
      // Predicated region
      $region41: #{fold_forward.1} parent=11 // pred_check
        %p345 = pneg %p254
      $region42: #{fold_forward.1} parent=11 // pred_check_branch
        %347 = sbr.rel (%p345) target = $region44
      $region43: #{fold_forward.1} parent=11 // pred_region
        _
      $region44: #{fold_forward.1} parent=11 // pred_fallthru
        _
      // Predicated region
      $region45: #{fold_forward.1} parent=11 // pred_check
        %p348 = pneg %p275
      $region46: #{fold_forward.1} parent=11 // pred_check_branch
        %350 = sbr.rel (%p348) target = $region48
      $region47: #{fold_forward.1} parent=11 // pred_region
        _
      $region48: #{fold_forward.1} parent=11 // pred_fallthru
        _
    $region12: #{fold_forward.1} parent=5 // pred_fallthru
      _
    %p351 = scmp.lt.s32.totalorder %s17, 2
    // Predicated region
    $region49: #{fold_forward.1} parent=5 // pred_check
      %p352 = pneg %p351
    $region50: #{fold_forward.1} parent=5 // pred_check_branch
      %354 = sbr.rel (%p352) target = $region52
    $region51: #{fold_forward.1} parent=5 // pred_region
      // Predicated region
      $region53: #{fold_forward.1} parent=51 // pred_check
        %p355 = pneg %p96
      $region54: #{fold_forward.1} parent=51 // pred_check_branch
        %357 = sbr.rel (%p355) target = $region56
      $region55: #{fold_forward.1} parent=51 // pred_region
        %p358 = scmp.lt.s32.totalorder %s24, 1
        %s359 = scalar_select %p358, %s24, 1
        %s360 = smul.addr %s359, 8
        %s361 = smul.addr %s360, 8
        %s362 = scalar_lea.vmem %s2, %s361
      $region56: #{fold_forward.1} parent=51 // pred_fallthru
        _
      // Predicated region
      $region57: #{fold_forward.1} parent=51 // pred_check
        %p363 = pneg %p122
      $region58: #{fold_forward.1} parent=51 // pred_check_branch
        %365 = sbr.rel (%p363) target = $region60
      $region59: #{fold_forward.1} parent=51 // pred_region
        %p366 = scmp.lt.s32.totalorder %s24, 1
        %s367 = scalar_select %p366, %s24, 1
        %s368 = smul.addr %s367, 8
        %s369 = smul.addr %s368, 8
        %s370 = scalar_lea.vmem %s3, %s369
      $region60: #{fold_forward.1} parent=51 // pred_fallthru
        _
    $region52: #{fold_forward.1} parent=5 // pred_fallthru
      _
    %p371 = scmp.le.s32.totalorder 1, %s17
    %p372 = scmp.lt.s32.totalorder %s17, 3
    %p373 = pnand %p371, %p372
    %p374 = pneg %p373
    // Predicated region
    $region61: #{fold_forward.1} parent=5 // pred_check
      _
    $region62: #{fold_forward.1} parent=5 // pred_check_branch
      %376 = sbr.rel (%p373) target = $region64
    $region63: #{fold_forward.1} parent=5 // pred_region
      %s377 = ssub.s32 %s17, 1
      %s378 = smul.u32 5, %s27
      %p379 = scmp.lt.s32.totalorder %s378, 4
      %s380 = scalar_select %p379, %s378, 4
      %s381 = smul.addr %s380, 2
      %s382 = scalar_lea.vmem %s0, %s381
      %p383 = pneg %p55
      %p384 = pneg %p52
      %p385 = pneg %p76
      %p386 = pneg %p73
      %p387 = scmp.lt.s32.totalorder %s26, 1
      %s388 = scalar_select %p387, %s26, 1
      %s389 = smul.addr %s388, 8
      %s390 = smul.addr %s389, 8
      %s391 = scalar_lea.vmem %s2, %s390
      %p392 = pneg %p102
      %p393 = pneg %p99
      %p394 = scmp.lt.s32.totalorder %s26, 1
      %s395 = scalar_select %p394, %s26, 1
      %s396 = smul.addr %s395, 8
      %s397 = smul.addr %s396, 8
      %s398 = scalar_lea.vmem %s3, %s397
      %p399 = pneg %p128
      %p400 = pneg %p125
      %p401 = pneg %p149
      %p402 = pneg %p146
      %p403 = pneg %p170
      %p404 = pneg %p167
      %p405 = pneg %p191
      %p406 = pneg %p188
      %p407 = pneg %p212
      %p408 = pneg %p209
      %p409 = pneg %p233
      %p410 = pneg %p230
      %p411 = pneg %p254
      %p412 = pneg %p251
      %p413 = pneg %p275
      %p414 = pneg %p272
      %p415 = pneg %p303
      %p416 = pneg %p300
      %s417 = smul.u32 5, %s27
      %p418 = scmp.lt.s32.totalorder %s26, 1
      %s419 = scalar_select %p418, %s26, 1
      %p420 = scmp.lt.s32.totalorder %s417, 4
      %s421 = scalar_select %p420, %s417, 4
      %s422 = smul.addr %s419, 5
      %s423 = sadd.s32 %s421, %s422
      %s424 = smul.addr %s423, 4
      %s425 = scalar_lea.vmem %s11, %s424
      %s426 = smul.u32 5, %s27
      %p427 = scmp.lt.s32.totalorder %s426, 4
      %s428 = scalar_select %p427, %s426, 4
      %s429 = smul.addr %s428, 2
      %s430 = scalar_lea.vmem %s0, %s429
      %s431 = smul.u32 5, %s27
      %p432 = scmp.lt.s32.totalorder %s26, 1
      %s433 = scalar_select %p432, %s26, 1
      %s434 = smul.addr %s433, 8
      %s435 = smul.addr %s434, 8
      %s436 = scalar_lea.vmem %s2, %s435
      %p437 = scmp.lt.s32.totalorder %s26, 1
      %s438 = scalar_select %p437, %s26, 1
      %s439 = smul.addr %s438, 8
      %s440 = smul.addr %s439, 8
      %s441 = scalar_lea.vmem %s3, %s440
      %s442 = smul.u32 5, %s27
      %p443 = scmp.lt.s32.totalorder %s26, 1
      %s444 = scalar_select %p443, %s26, 1
      %p445 = scmp.lt.s32.totalorder %s442, 4
      %s446 = scalar_select %p445, %s442, 4
      %s447 = smul.addr %s444, 5
      %s448 = sadd.s32 %s446, %s447
      %s449 = smul.addr %s448, 4
      %s450 = scalar_lea.vmem %s11, %s449
      %s451 = smul.u32 5, %s27
      %v453 = vld [vmem:[%s430] sm:$0xff]
      %v454 = vld [vmem:[%s430 + $0x8] sm:$0x3]
      %v455 = vld [vmem:[%s1] sm:$0xff]
      %v456 = vld [vmem:[%s1 + $0x8] sm:$0xff]
      %v457 = vld [vmem:[%s1 + $0x10] sm:$0xff]
      %v458 = vld [vmem:[%s1 + $0x18] sm:$0xff]
      %v459 = vld [vmem:[%s1 + $0x20] sm:$0xff]
      %v460 = vld [vmem:[%s1 + $0x28] sm:$0xff]
      %v461 = vld [vmem:[%s1 + $0x30] sm:$0xff]
      %v462 = vld [vmem:[%s1 + $0x38] sm:$0xff]
      %464 = vset.pattern.permute.xlu0 0
      %465 = vperm.xlu0 %464, %v455
      %v466 = vpop.permute.xlu0 %465
      %469 = vset.pattern.permute.xlu0 0
      %470 = vperm.xlu0 %469, %v456
      %v471 = vpop.permute.xlu0 %470
      %474 = vset.pattern.permute.xlu0 0
      %475 = vperm.xlu0 %474, %v457
      %v476 = vpop.permute.xlu0 %475
      %479 = vset.pattern.permute.xlu0 0
      %480 = vperm.xlu0 %479, %v458
      %v481 = vpop.permute.xlu0 %480
      %484 = vset.pattern.permute.xlu0 0
      %485 = vperm.xlu0 %484, %v459
      %v486 = vpop.permute.xlu0 %485
      %489 = vset.pattern.permute.xlu0 0
      %490 = vperm.xlu0 %489, %v460
      %v491 = vpop.permute.xlu0 %490
      %494 = vset.pattern.permute.xlu0 0
      %495 = vperm.xlu0 %494, %v461
      %v496 = vpop.permute.xlu0 %495
      %499 = vset.pattern.permute.xlu0 0
      %500 = vperm.xlu0 %499, %v462
      %v501 = vpop.permute.xlu0 %500
      %v505 = vlaneseq
      %v506 = vshrl.u32 %v505, 7
      %v507 = vsub.s32 0, %v506
      %v508 = vrot.slane %v453, %v507
      %v509 = vlaneseq
      %v510 = vshrl.u32 %v509, 7
      %v511 = vsub.s32 2, %v510
      %v512 = vrot.slane %v453, %v511
      %v513 = vlaneseq
      %v514 = vshrl.u32 %v513, 7
      %v515 = vsub.s32 4, %v514
      %v516 = vrot.slane %v453, %v515
      %v517 = vlaneseq
      %v518 = vshrl.u32 %v517, 7
      %v519 = vsub.s32 6, %v518
      %v520 = vrot.slane %v453, %v519
      %v521 = vlaneseq
      %v522 = vshrl.u32 %v521, 7
      %v523 = vsub.s32 0, %v522
      %v524 = vrot.slane %v454, %v523
      %v530 = vlaneseq
      %v531 = vshrl.u32 %v530, 7
      %v532 = vsub.s32 0, %v531
      %v533 = vrot.slane %v508, %v532
      %v534 = vlaneseq
      %v535 = vshrl.u32 %v534, 7
      %v536 = vsub.s32 0, %v535
      %v537 = vrot.slane %v512, %v536
      %v538 = vlaneseq
      %v539 = vshrl.u32 %v538, 7
      %v540 = vsub.s32 0, %v539
      %v541 = vrot.slane %v516, %v540
      %v542 = vlaneseq
      %v543 = vshrl.u32 %v542, 7
      %v544 = vsub.s32 0, %v543
      %v545 = vrot.slane %v520, %v544
      %v546 = vlaneseq
      %v547 = vshrl.u32 %v546, 7
      %v548 = vsub.s32 0, %v547
      %v549 = vrot.slane %v524, %v548
      %v550 = vmul.f32 %v466, %v533
      %v551 = vmul.f32 %v466, %v537
      %v552 = vmul.f32 %v466, %v541
      %v553 = vmul.f32 %v466, %v545
      %v554 = vmul.f32 %v466, %v549
      %v555 = vmul.f32 %v471, %v533
      %v556 = vmul.f32 %v471, %v537
      %v557 = vmul.f32 %v471, %v541
      %v558 = vmul.f32 %v471, %v545
      %v559 = vmul.f32 %v471, %v549
      %v560 = vmul.f32 %v476, %v533
      %v561 = vmul.f32 %v476, %v537
      %v562 = vmul.f32 %v476, %v541
      %v563 = vmul.f32 %v476, %v545
      %v564 = vmul.f32 %v476, %v549
      %v565 = vmul.f32 %v481, %v533
      %v566 = vmul.f32 %v481, %v537
      %v567 = vmul.f32 %v481, %v541
      %v568 = vmul.f32 %v481, %v545
      %v569 = vmul.f32 %v481, %v549
      %v570 = vmul.f32 %v486, %v533
      %v571 = vmul.f32 %v486, %v537
      %v572 = vmul.f32 %v486, %v541
      %v573 = vmul.f32 %v486, %v545
      %v574 = vmul.f32 %v486, %v549
      %v575 = vmul.f32 %v491, %v533
      %v576 = vmul.f32 %v491, %v537
      %v577 = vmul.f32 %v491, %v541
      %v578 = vmul.f32 %v491, %v545
      %v579 = vmul.f32 %v491, %v549
      %v580 = vmul.f32 %v496, %v533
      %v581 = vmul.f32 %v496, %v537
      %v582 = vmul.f32 %v496, %v541
      %v583 = vmul.f32 %v496, %v545
      %v584 = vmul.f32 %v496, %v549
      %v585 = vmul.f32 %v501, %v533
      %v586 = vmul.f32 %v501, %v537
      %v587 = vmul.f32 %v501, %v541
      %v588 = vmul.f32 %v501, %v545
      %v589 = vmul.f32 %v501, %v549
      %s590 = scalar_lea.vmem %s1, 64
      %v591 = vld [vmem:[%s590] sm:$0xff]
      %v592 = vld [vmem:[%s590 + $0x8] sm:$0xff]
      %v593 = vld [vmem:[%s590 + $0x10] sm:$0xff]
      %v594 = vld [vmem:[%s590 + $0x18] sm:$0xff]
      %v595 = vld [vmem:[%s590 + $0x20] sm:$0xff]
      %v596 = vld [vmem:[%s590 + $0x28] sm:$0xff]
      %v597 = vld [vmem:[%s590 + $0x30] sm:$0xff]
      %v598 = vld [vmem:[%s590 + $0x38] sm:$0xff]
      %600 = vset.pattern.permute.xlu0 0
      %601 = vperm.xlu0 %600, %v591
      %v602 = vpop.permute.xlu0 %601
      %605 = vset.pattern.permute.xlu0 0
      %606 = vperm.xlu0 %605, %v592
      %v607 = vpop.permute.xlu0 %606
      %610 = vset.pattern.permute.xlu0 0
      %611 = vperm.xlu0 %610, %v593
      %v612 = vpop.permute.xlu0 %611
      %615 = vset.pattern.permute.xlu0 0
      %616 = vperm.xlu0 %615, %v594
      %v617 = vpop.permute.xlu0 %616
      %620 = vset.pattern.permute.xlu0 0
      %621 = vperm.xlu0 %620, %v595
      %v622 = vpop.permute.xlu0 %621
      %625 = vset.pattern.permute.xlu0 0
      %626 = vperm.xlu0 %625, %v596
      %v627 = vpop.permute.xlu0 %626
      %630 = vset.pattern.permute.xlu0 0
      %631 = vperm.xlu0 %630, %v597
      %v632 = vpop.permute.xlu0 %631
      %635 = vset.pattern.permute.xlu0 0
      %636 = vperm.xlu0 %635, %v598
      %v637 = vpop.permute.xlu0 %636
      %v639 = vlaneseq
      %v640 = vshrl.u32 %v639, 7
      %v641 = vsub.s32 1, %v640
      %v642 = vrot.slane %v453, %v641
      %v643 = vlaneseq
      %v644 = vshrl.u32 %v643, 7
      %v645 = vsub.s32 3, %v644
      %v646 = vrot.slane %v453, %v645
      %v647 = vlaneseq
      %v648 = vshrl.u32 %v647, 7
      %v649 = vsub.s32 5, %v648
      %v650 = vrot.slane %v453, %v649
      %v651 = vlaneseq
      %v652 = vshrl.u32 %v651, 7
      %v653 = vsub.s32 7, %v652
      %v654 = vrot.slane %v453, %v653
      %v655 = vlaneseq
      %v656 = vshrl.u32 %v655, 7
      %v657 = vsub.s32 1, %v656
      %v658 = vrot.slane %v454, %v657
      %v664 = vlaneseq
      %v665 = vshrl.u32 %v664, 7
      %v666 = vsub.s32 1, %v665
      %v667 = vrot.slane %v642, %v666
      %v668 = vlaneseq
      %v669 = vshrl.u32 %v668, 7
      %v670 = vsub.s32 1, %v669
      %v671 = vrot.slane %v646, %v670
      %v672 = vlaneseq
      %v673 = vshrl.u32 %v672, 7
      %v674 = vsub.s32 1, %v673
      %v675 = vrot.slane %v650, %v674
      %v676 = vlaneseq
      %v677 = vshrl.u32 %v676, 7
      %v678 = vsub.s32 1, %v677
      %v679 = vrot.slane %v654, %v678
      %v680 = vlaneseq
      %v681 = vshrl.u32 %v680, 7
      %v682 = vsub.s32 1, %v681
      %v683 = vrot.slane %v658, %v682
      %v684 = vmul.f32 %v602, %v667
      %v685 = vmul.f32 %v602, %v671
      %v686 = vmul.f32 %v602, %v675
      %v687 = vmul.f32 %v602, %v679
      %v688 = vmul.f32 %v602, %v683
      %v689 = vmul.f32 %v607, %v667
      %v690 = vmul.f32 %v607, %v671
      %v691 = vmul.f32 %v607, %v675
      %v692 = vmul.f32 %v607, %v679
      %v693 = vmul.f32 %v607, %v683
      %v694 = vmul.f32 %v612, %v667
      %v695 = vmul.f32 %v612, %v671
      %v696 = vmul.f32 %v612, %v675
      %v697 = vmul.f32 %v612, %v679
      %v698 = vmul.f32 %v612, %v683
      %v699 = vmul.f32 %v617, %v667
      %v700 = vmul.f32 %v617, %v671
      %v701 = vmul.f32 %v617, %v675
      %v702 = vmul.f32 %v617, %v679
      %v703 = vmul.f32 %v617, %v683
      %v704 = vmul.f32 %v622, %v667
      %v705 = vmul.f32 %v622, %v671
      %v706 = vmul.f32 %v622, %v675
      %v707 = vmul.f32 %v622, %v679
      %v708 = vmul.f32 %v622, %v683
      %v709 = vmul.f32 %v627, %v667
      %v710 = vmul.f32 %v627, %v671
      %v711 = vmul.f32 %v627, %v675
      %v712 = vmul.f32 %v627, %v679
      %v713 = vmul.f32 %v627, %v683
      %v714 = vmul.f32 %v632, %v667
      %v715 = vmul.f32 %v632, %v671
      %v716 = vmul.f32 %v632, %v675
      %v717 = vmul.f32 %v632, %v679
      %v718 = vmul.f32 %v632, %v683
      %v719 = vmul.f32 %v637, %v667
      %v720 = vmul.f32 %v637, %v671
      %v721 = vmul.f32 %v637, %v675
      %v722 = vmul.f32 %v637, %v679
      %v723 = vmul.f32 %v637, %v683
      %v724 = vadd.f32 %v550, %v684
      %v725 = vadd.f32 %v551, %v685
      %v726 = vadd.f32 %v552, %v686
      %v727 = vadd.f32 %v553, %v687
      %v728 = vadd.f32 %v554, %v688
      %v729 = vadd.f32 %v555, %v689
      %v730 = vadd.f32 %v556, %v690
      %v731 = vadd.f32 %v557, %v691
      %v732 = vadd.f32 %v558, %v692
      %v733 = vadd.f32 %v559, %v693
      %v734 = vadd.f32 %v560, %v694
      %v735 = vadd.f32 %v561, %v695
      %v736 = vadd.f32 %v562, %v696
      %v737 = vadd.f32 %v563, %v697
      %v738 = vadd.f32 %v564, %v698
      %v739 = vadd.f32 %v565, %v699
      %v740 = vadd.f32 %v566, %v700
      %v741 = vadd.f32 %v567, %v701
      %v742 = vadd.f32 %v568, %v702
      %v743 = vadd.f32 %v569, %v703
      %v744 = vadd.f32 %v570, %v704
      %v745 = vadd.f32 %v571, %v705
      %v746 = vadd.f32 %v572, %v706
      %v747 = vadd.f32 %v573, %v707
      %v748 = vadd.f32 %v574, %v708
      %v749 = vadd.f32 %v575, %v709
      %v750 = vadd.f32 %v576, %v710
      %v751 = vadd.f32 %v577, %v711
      %v752 = vadd.f32 %v578, %v712
      %v753 = vadd.f32 %v579, %v713
      %v754 = vadd.f32 %v580, %v714
      %v755 = vadd.f32 %v581, %v715
      %v756 = vadd.f32 %v582, %v716
      %v757 = vadd.f32 %v583, %v717
      %v758 = vadd.f32 %v584, %v718
      %v759 = vadd.f32 %v585, %v719
      %v760 = vadd.f32 %v586, %v720
      %v761 = vadd.f32 %v587, %v721
      %v762 = vadd.f32 %v588, %v722
      %v763 = vadd.f32 %v589, %v723
      %v764 = vld [vmem:[%s436] sm:$0xff]
      %v765 = vld [vmem:[%s436 + $0x8] sm:$0xff]
      %v766 = vld [vmem:[%s436 + $0x10] sm:$0xff]
      %v767 = vld [vmem:[%s436 + $0x18] sm:$0xff]
      %v768 = vld [vmem:[%s436 + $0x20] sm:$0xff]
      %v769 = vld [vmem:[%s436 + $0x28] sm:$0xff]
      %v770 = vld [vmem:[%s436 + $0x30] sm:$0xff]
      %v771 = vld [vmem:[%s436 + $0x38] sm:$0xff]
      %773 = vset.pattern.permute.xlu0 0
      %774 = vperm.xlu0 %773, %v764
      %v775 = vpop.permute.xlu0 %774
      %778 = vset.pattern.permute.xlu0 0
      %779 = vperm.xlu0 %778, %v765
      %v780 = vpop.permute.xlu0 %779
      %783 = vset.pattern.permute.xlu0 0
      %784 = vperm.xlu0 %783, %v766
      %v785 = vpop.permute.xlu0 %784
      %788 = vset.pattern.permute.xlu0 0
      %789 = vperm.xlu0 %788, %v767
      %v790 = vpop.permute.xlu0 %789
      %793 = vset.pattern.permute.xlu0 0
      %794 = vperm.xlu0 %793, %v768
      %v795 = vpop.permute.xlu0 %794
      %798 = vset.pattern.permute.xlu0 0
      %799 = vperm.xlu0 %798, %v769
      %v800 = vpop.permute.xlu0 %799
      %803 = vset.pattern.permute.xlu0 0
      %804 = vperm.xlu0 %803, %v770
      %v805 = vpop.permute.xlu0 %804
      %808 = vset.pattern.permute.xlu0 0
      %809 = vperm.xlu0 %808, %v771
      %v810 = vpop.permute.xlu0 %809
      %v812 = vadd.f32 %v724, %v775
      %v813 = vadd.f32 %v725, %v775
      %v814 = vadd.f32 %v726, %v775
      %v815 = vadd.f32 %v727, %v775
      %v816 = vadd.f32 %v728, %v775
      %v817 = vadd.f32 %v729, %v780
      %v818 = vadd.f32 %v730, %v780
      %v819 = vadd.f32 %v731, %v780
      %v820 = vadd.f32 %v732, %v780
      %v821 = vadd.f32 %v733, %v780
      %v822 = vadd.f32 %v734, %v785
      %v823 = vadd.f32 %v735, %v785
      %v824 = vadd.f32 %v736, %v785
      %v825 = vadd.f32 %v737, %v785
      %v826 = vadd.f32 %v738, %v785
      %v827 = vadd.f32 %v739, %v790
      %v828 = vadd.f32 %v740, %v790
      %v829 = vadd.f32 %v741, %v790
      %v830 = vadd.f32 %v742, %v790
      %v831 = vadd.f32 %v743, %v790
      %v832 = vadd.f32 %v744, %v795
      %v833 = vadd.f32 %v745, %v795
      %v834 = vadd.f32 %v746, %v795
      %v835 = vadd.f32 %v747, %v795
      %v836 = vadd.f32 %v748, %v795
      %v837 = vadd.f32 %v749, %v800
      %v838 = vadd.f32 %v750, %v800
      %v839 = vadd.f32 %v751, %v800
      %v840 = vadd.f32 %v752, %v800
      %v841 = vadd.f32 %v753, %v800
      %v842 = vadd.f32 %v754, %v805
      %v843 = vadd.f32 %v755, %v805
      %v844 = vadd.f32 %v756, %v805
      %v845 = vadd.f32 %v757, %v805
      %v846 = vadd.f32 %v758, %v805
      %v847 = vadd.f32 %v759, %v810
      %v848 = vadd.f32 %v760, %v810
      %v849 = vadd.f32 %v761, %v810
      %v850 = vadd.f32 %v762, %v810
      %v851 = vadd.f32 %v763, %v810
      %v852 = vmax.f32 %v812, 0.0
      %v853 = vmax.f32 %v813, 0.0
      %v854 = vmax.f32 %v814, 0.0
      %v855 = vmax.f32 %v815, 0.0
      %v856 = vmax.f32 %v816, 0.0
      %v857 = vmax.f32 %v817, 0.0
      %v858 = vmax.f32 %v818, 0.0
      %v859 = vmax.f32 %v819, 0.0
      %v860 = vmax.f32 %v820, 0.0
      %v861 = vmax.f32 %v821, 0.0
      %v862 = vmax.f32 %v822, 0.0
      %v863 = vmax.f32 %v823, 0.0
      %v864 = vmax.f32 %v824, 0.0
      %v865 = vmax.f32 %v825, 0.0
      %v866 = vmax.f32 %v826, 0.0
      %v867 = vmax.f32 %v827, 0.0
      %v868 = vmax.f32 %v828, 0.0
      %v869 = vmax.f32 %v829, 0.0
      %v870 = vmax.f32 %v830, 0.0
      %v871 = vmax.f32 %v831, 0.0
      %v872 = vmax.f32 %v832, 0.0
      %v873 = vmax.f32 %v833, 0.0
      %v874 = vmax.f32 %v834, 0.0
      %v875 = vmax.f32 %v835, 0.0
      %v876 = vmax.f32 %v836, 0.0
      %v877 = vmax.f32 %v837, 0.0
      %v878 = vmax.f32 %v838, 0.0
      %v879 = vmax.f32 %v839, 0.0
      %v880 = vmax.f32 %v840, 0.0
      %v881 = vmax.f32 %v841, 0.0
      %v882 = vmax.f32 %v842, 0.0
      %v883 = vmax.f32 %v843, 0.0
      %v884 = vmax.f32 %v844, 0.0
      %v885 = vmax.f32 %v845, 0.0
      %v886 = vmax.f32 %v846, 0.0
      %v887 = vmax.f32 %v847, 0.0
      %v888 = vmax.f32 %v848, 0.0
      %v889 = vmax.f32 %v849, 0.0
      %v890 = vmax.f32 %v850, 0.0
      %v891 = vmax.f32 %v851, 0.0
      %v892 = vpack.c.bf16 %v857, %v852
      %v893 = vpack.c.bf16 %v858, %v853
      %v894 = vpack.c.bf16 %v859, %v854
      %v895 = vpack.c.bf16 %v860, %v855
      %v896 = vpack.c.bf16 %v861, %v856
      %v897 = vpack.c.bf16 %v867, %v862
      %v898 = vpack.c.bf16 %v868, %v863
      %v899 = vpack.c.bf16 %v869, %v864
      %v900 = vpack.c.bf16 %v870, %v865
      %v901 = vpack.c.bf16 %v871, %v866
      %v902 = vpack.c.bf16 %v877, %v872
      %v903 = vpack.c.bf16 %v878, %v873
      %v904 = vpack.c.bf16 %v879, %v874
      %v905 = vpack.c.bf16 %v880, %v875
      %v906 = vpack.c.bf16 %v881, %v876
      %v907 = vpack.c.bf16 %v887, %v882
      %v908 = vpack.c.bf16 %v888, %v883
      %v909 = vpack.c.bf16 %v889, %v884
      %v910 = vpack.c.bf16 %v890, %v885
      %v911 = vpack.c.bf16 %v891, %v886
      %v912 = vld [vmem:[%s4] sm:$0xf]
      %v913 = vld [vmem:[%s4 + $0x4] sm:$0xf]
      %v914 = vld [vmem:[%s4 + $0x8] sm:$0xf]
      %v915 = vld [vmem:[%s4 + $0xc] sm:$0xf]
      %v916 = vld [vmem:[%s5] sm:$0xff]
      %v917 = vld [vmem:[%s5 + $0x8] sm:$0xff]
      %v918 = vld [vmem:[%s5 + $0x10] sm:$0xff]
      %v919 = vld [vmem:[%s5 + $0x18] sm:$0xff]
      %921 = vset.pattern.permute.xlu0 0
      %922 = vperm.xlu0 %921, %v916
      %v923 = vpop.permute.xlu0 %922
      %926 = vset.pattern.permute.xlu0 0
      %927 = vperm.xlu0 %926, %v917
      %v928 = vpop.permute.xlu0 %927
      %931 = vset.pattern.permute.xlu0 0
      %932 = vperm.xlu0 %931, %v918
      %v933 = vpop.permute.xlu0 %932
      %936 = vset.pattern.permute.xlu0 0
      %937 = vperm.xlu0 %936, %v919
      %v938 = vpop.permute.xlu0 %937
      %v944 = vunpack.c.l.b16 %v912
      %v945 = vunpack.c.l.b16 %v913
      %v946 = vunpack.c.l.b16 %v914
      %v947 = vunpack.c.l.b16 %v915
      %v948 = vpack.c.b16 %v945, %v944
      %v949 = vpack.c.b16 %v947, %v946
      %vm950 = vcmask 523264
      %v952 = vsel %vm950, %v948, 0
      %v955 = vsel %vm950, %v949, 0
      %957 = vmatprep.subr.bf16.mxu0 0
      %958 = vmatpush1.bf16.msra.mxu0 0
      %959 = vmatprep.subr.bf16.mxu0 0
      %960 = vmatpush1.bf16.msra.mxu0 0
      %961 = vmatprep.subr.bf16.mxu0 0
      %962 = vmatpush1.bf16.msra.mxu0 0
      %963 = vmatprep.subr.bf16.mxu0 0
      %964 = vmatpush1.bf16.msra.mxu0 0
      %965 = vmatprep.subr.bf16.mxu0 %v908
      %966 = vmatpush1.bf16.msra.mxu0 %v907
      %967 = vmatprep.subr.bf16.mxu0 %v903
      %968 = vmatpush1.bf16.msra.mxu0 %v902
      %969 = vmatprep.subr.bf16.mxu0 %v898
      %970 = vmatpush1.bf16.msra.mxu0 %v897
      %971 = vmatprep.subr.bf16.mxu0 %v893
      %972 = vmatpush1.bf16.msra.mxu0 %v892
      %973 = vmatprep.subr.bf16.mxu0 0
      %974 = vmatpush2.bf16.msra.mxu0 0
      %975 = vmatprep.subr.bf16.mxu0 0
      %976 = vmatpush2.bf16.msra.mxu0 0
      %977 = vmatprep.subr.bf16.mxu0 0
      %978 = vmatpush2.bf16.msra.mxu0 0
      %979 = vmatprep.subr.bf16.mxu0 0
      %980 = vmatpush2.bf16.msra.mxu0 0
      %981 = vmatprep.subr.bf16.mxu0 0
      %982 = vmatpush2.bf16.msra.mxu0 0
      %983 = vmatprep.subr.bf16.mxu0 0
      %984 = vmatpush2.bf16.msra.mxu0 0
      %985 = vmatprep.subr.bf16.mxu0 0
      %986 = vmatpush2.bf16.msra.mxu0 0
      %987 = vmatprep.subr.bf16.mxu0 0
      %988 = vmatpush2.bf16.msra.mxu0 0
      %989 = vmatprep.mubr.bf16.mxu0 0
      %990 = vmatmul.mubr.bf16.gmra.mxu0 %v952
      %v991 = vpop.f32.mrf.mxu0
      %v992 = vadd.f32 %v923, %v991
      %v993 = vpop.f32.mrf.mxu0
      %v994 = vadd.f32 %v923, %v993
      %v995 = vpop.f32.mrf.mxu0
      %v996 = vadd.f32 %v928, %v995
      %v997 = vpop.f32.mrf.mxu0
      %v998 = vadd.f32 %v928, %v997
      %999 = vmatprep.mubr.bf16.mxu0 0
      %1000 = vmatmul.mubr.bf16.gmra.mxu0 %v955
      %v1001 = vpop.f32.mrf.mxu0
      %v1002 = vadd.f32 %v933, %v1001
      %v1003 = vpop.f32.mrf.mxu0
      %v1004 = vadd.f32 %v933, %v1003
      %v1005 = vpop.f32.mrf.mxu0
      %v1006 = vadd.f32 %v938, %v1005
      %v1007 = vpop.f32.mrf.mxu0
      %v1008 = vadd.f32 %v938, %v1007
      %1009 = vdwg.mxu0
      %1010 = vmatprep.subr.bf16.mxu0 0
      %1011 = vmatpush1.bf16.msra.mxu0 0
      %1012 = vmatprep.subr.bf16.mxu0 0
      %1013 = vmatpush1.bf16.msra.mxu0 0
      %1014 = vmatprep.subr.bf16.mxu0 0
      %1015 = vmatpush1.bf16.msra.mxu0 0
      %1016 = vmatprep.subr.bf16.mxu0 0
      %1017 = vmatpush1.bf16.msra.mxu0 0
      %1018 = vmatprep.subr.bf16.mxu0 %v910
      %1019 = vmatpush1.bf16.msra.mxu0 %v909
      %1020 = vmatprep.subr.bf16.mxu0 %v905
      %1021 = vmatpush1.bf16.msra.mxu0 %v904
      %1022 = vmatprep.subr.bf16.mxu0 %v900
      %1023 = vmatpush1.bf16.msra.mxu0 %v899
      %1024 = vmatprep.subr.bf16.mxu0 %v895
      %1025 = vmatpush1.bf16.msra.mxu0 %v894
      %1026 = vmatprep.subr.bf16.mxu0 0
      %1027 = vmatpush2.bf16.msra.mxu0 0
      %1028 = vmatprep.subr.bf16.mxu0 0
      %1029 = vmatpush2.bf16.msra.mxu0 0
      %1030 = vmatprep.subr.bf16.mxu0 0
      %1031 = vmatpush2.bf16.msra.mxu0 0
      %1032 = vmatprep.subr.bf16.mxu0 0
      %1033 = vmatpush2.bf16.msra.mxu0 0
      %1034 = vmatprep.subr.bf16.mxu0 0
      %1035 = vmatpush2.bf16.msra.mxu0 0
      %1036 = vmatprep.subr.bf16.mxu0 0
      %1037 = vmatpush2.bf16.msra.mxu0 0
      %1038 = vmatprep.subr.bf16.mxu0 0
      %1039 = vmatpush2.bf16.msra.mxu0 0
      %1040 = vmatprep.subr.bf16.mxu0 0
      %1041 = vmatpush2.bf16.msra.mxu0 0
      %1042 = vmatprep.mubr.bf16.mxu0 0
      %1043 = vmatmul.mubr.bf16.gmra.mxu0 %v952
      %v1044 = vpop.f32.mrf.mxu0
      %v1045 = vadd.f32 %v923, %v1044
      %v1046 = vpop.f32.mrf.mxu0
      %v1047 = vadd.f32 %v923, %v1046
      %v1048 = vpop.f32.mrf.mxu0
      %v1049 = vadd.f32 %v928, %v1048
      %v1050 = vpop.f32.mrf.mxu0
      %v1051 = vadd.f32 %v928, %v1050
      %1052 = vmatprep.mubr.bf16.mxu0 0
      %1053 = vmatmul.mubr.bf16.gmra.mxu0 %v955
      %v1054 = vpop.f32.mrf.mxu0
      %v1055 = vadd.f32 %v933, %v1054
      %v1056 = vpop.f32.mrf.mxu0
      %v1057 = vadd.f32 %v933, %v1056
      %v1058 = vpop.f32.mrf.mxu0
      %v1059 = vadd.f32 %v938, %v1058
      %v1060 = vpop.f32.mrf.mxu0
      %v1061 = vadd.f32 %v938, %v1060
      %1062 = vdwg.mxu0
      %1063 = vmatprep.subr.bf16.mxu0 0
      %1064 = vmatpush1.bf16.msra.mxu0 0
      %1065 = vmatprep.subr.bf16.mxu0 0
      %1066 = vmatpush1.bf16.msra.mxu0 0
      %1067 = vmatprep.subr.bf16.mxu0 0
      %1068 = vmatpush1.bf16.msra.mxu0 0
      %1069 = vmatprep.subr.bf16.mxu0 0
      %1070 = vmatpush1.bf16.msra.mxu0 0
      %1071 = vmatprep.subr.bf16.mxu0 0
      %1072 = vmatpush1.bf16.msra.mxu0 %v911
      %1073 = vmatprep.subr.bf16.mxu0 0
      %1074 = vmatpush1.bf16.msra.mxu0 %v906
      %1075 = vmatprep.subr.bf16.mxu0 0
      %1076 = vmatpush1.bf16.msra.mxu0 %v901
      %1077 = vmatprep.subr.bf16.mxu0 0
      %1078 = vmatpush1.bf16.msra.mxu0 %v896
      %1079 = vmatprep.subr.bf16.mxu0 0
      %1080 = vmatpush2.bf16.msra.mxu0 0
      %1081 = vmatprep.subr.bf16.mxu0 0
      %1082 = vmatpush2.bf16.msra.mxu0 0
      %1083 = vmatprep.subr.bf16.mxu0 0
      %1084 = vmatpush2.bf16.msra.mxu0 0
      %1085 = vmatprep.subr.bf16.mxu0 0
      %1086 = vmatpush2.bf16.msra.mxu0 0
      %1087 = vmatprep.subr.bf16.mxu0 0
      %1088 = vmatpush2.bf16.msra.mxu0 0
      %1089 = vmatprep.subr.bf16.mxu0 0
      %1090 = vmatpush2.bf16.msra.mxu0 0
      %1091 = vmatprep.subr.bf16.mxu0 0
      %1092 = vmatpush2.bf16.msra.mxu0 0
      %1093 = vmatprep.subr.bf16.mxu0 0
      %1094 = vmatpush2.bf16.msra.mxu0 0
      %1095 = vmatprep.mubr.bf16.mxu0 0
      %1096 = vmatmul.mubr.bf16.gmra.mxu0 %v952
      %v1097 = vpop.f32.mrf.mxu0
      %v1098 = vadd.f32 %v923, %v1097
      %v1099 = vpop.f32.mrf.mxu0
      %v1100 = vpop.f32.mrf.mxu0
      %v1101 = vadd.f32 %v928, %v1100
      %v1102 = vpop.f32.mrf.mxu0
      %1103 = vmatprep.mubr.bf16.mxu0 0
      %1104 = vmatmul.mubr.bf16.gmra.mxu0 %v955
      %v1105 = vpop.f32.mrf.mxu0
      %v1106 = vadd.f32 %v933, %v1105
      %v1107 = vpop.f32.mrf.mxu0
      %v1108 = vpop.f32.mrf.mxu0
      %v1109 = vadd.f32 %v938, %v1108
      %v1110 = vpop.f32.mrf.mxu0
      %1111 = vdwg.mxu0
      %v1112 = vmax.f32 %v992, 0.0
      %v1113 = vmax.f32 %v994, 0.0
      %v1114 = vmax.f32 %v1045, 0.0
      %v1115 = vmax.f32 %v1047, 0.0
      %v1116 = vmax.f32 %v1098, 0.0
      %v1117 = vmax.f32 %v996, 0.0
      %v1118 = vmax.f32 %v998, 0.0
      %v1119 = vmax.f32 %v1049, 0.0
      %v1120 = vmax.f32 %v1051, 0.0
      %v1121 = vmax.f32 %v1101, 0.0
      %v1122 = vmax.f32 %v1002, 0.0
      %v1123 = vmax.f32 %v1004, 0.0
      %v1124 = vmax.f32 %v1055, 0.0
      %v1125 = vmax.f32 %v1057, 0.0
      %v1126 = vmax.f32 %v1106, 0.0
      %v1127 = vmax.f32 %v1006, 0.0
      %v1128 = vmax.f32 %v1008, 0.0
      %v1129 = vmax.f32 %v1059, 0.0
      %v1130 = vmax.f32 %v1061, 0.0
      %v1131 = vmax.f32 %v1109, 0.0
      %v1132 = vpack.c.bf16 %v1117, %v1112
      %v1133 = vpack.c.bf16 %v1118, %v1113
      %v1134 = vpack.c.bf16 %v1119, %v1114
      %v1135 = vpack.c.bf16 %v1120, %v1115
      %v1136 = vpack.c.bf16 %v1121, %v1116
      %v1137 = vpack.c.bf16 %v1127, %v1122
      %v1138 = vpack.c.bf16 %v1128, %v1123
      %v1139 = vpack.c.bf16 %v1129, %v1124
      %v1140 = vpack.c.bf16 %v1130, %v1125
      %v1141 = vpack.c.bf16 %v1131, %v1126
      %v1142 = vld [vmem:[%s6] sm:$0xf]
      %v1143 = vld [vmem:[%s6 + $0x4] sm:$0xf]
      %v1144 = vld [vmem:[%s6 + $0x8] sm:$0xf]
      %v1145 = vld [vmem:[%s6 + $0xc] sm:$0xf]
      %v1146 = vld [vmem:[%s6 + $0x10] sm:$0xf]
      %v1147 = vld [vmem:[%s6 + $0x14] sm:$0xf]
      %v1148 = vld [vmem:[%s6 + $0x18] sm:$0xf]
      %v1149 = vld [vmem:[%s6 + $0x1c] sm:$0xf]
      %v1150 = vld [vmem:[%s441] sm:$0xff]
      %v1151 = vld [vmem:[%s441 + $0x8] sm:$0xff]
      %v1152 = vld [vmem:[%s441 + $0x10] sm:$0xff]
      %v1153 = vld [vmem:[%s441 + $0x18] sm:$0xff]
      %v1154 = vld [vmem:[%s441 + $0x20] sm:$0xff]
      %v1155 = vld [vmem:[%s441 + $0x28] sm:$0xff]
      %v1156 = vld [vmem:[%s441 + $0x30] sm:$0xff]
      %v1157 = vld [vmem:[%s441 + $0x38] sm:$0xff]
      %1159 = vset.pattern.permute.xlu0 0
      %1160 = vperm.xlu0 %1159, %v1150
      %v1161 = vpop.permute.xlu0 %1160
      %1164 = vset.pattern.permute.xlu0 0
      %1165 = vperm.xlu0 %1164, %v1151
      %v1166 = vpop.permute.xlu0 %1165
      %1169 = vset.pattern.permute.xlu0 0
      %1170 = vperm.xlu0 %1169, %v1152
      %v1171 = vpop.permute.xlu0 %1170
      %1174 = vset.pattern.permute.xlu0 0
      %1175 = vperm.xlu0 %1174, %v1153
      %v1176 = vpop.permute.xlu0 %1175
      %1179 = vset.pattern.permute.xlu0 0
      %1180 = vperm.xlu0 %1179, %v1154
      %v1181 = vpop.permute.xlu0 %1180
      %1184 = vset.pattern.permute.xlu0 0
      %1185 = vperm.xlu0 %1184, %v1155
      %v1186 = vpop.permute.xlu0 %1185
      %1189 = vset.pattern.permute.xlu0 0
      %1190 = vperm.xlu0 %1189, %v1156
      %v1191 = vpop.permute.xlu0 %1190
      %1194 = vset.pattern.permute.xlu0 0
      %1195 = vperm.xlu0 %1194, %v1157
      %v1196 = vpop.permute.xlu0 %1195
      %v1206 = vunpack.c.l.b16 %v1142
      %v1207 = vunpack.c.l.b16 %v1143
      %v1208 = vunpack.c.l.b16 %v1144
      %v1209 = vunpack.c.l.b16 %v1145
      %v1210 = vunpack.c.l.b16 %v1146
      %v1211 = vunpack.c.l.b16 %v1147
      %v1212 = vunpack.c.l.b16 %v1148
      %v1213 = vunpack.c.l.b16 %v1149
      %v1214 = vpack.c.b16 %v1207, %v1206
      %v1215 = vpack.c.b16 %v1209, %v1208
      %v1216 = vpack.c.b16 %v1211, %v1210
      %v1217 = vpack.c.b16 %v1213, %v1212
      %vm1218 = vcmask 261120
      %v1220 = vsel %vm1218, %v1214, 0
      %v1223 = vsel %vm1218, %v1215, 0
      %v1226 = vsel %vm1218, %v1216, 0
      %v1229 = vsel %vm1218, %v1217, 0
      %1231 = vmatprep.subr.bf16.mxu0 0
      %1232 = vmatpush1.bf16.msra.mxu0 0
      %1233 = vmatprep.subr.bf16.mxu0 0
      %1234 = vmatpush1.bf16.msra.mxu0 0
      %1235 = vmatprep.subr.bf16.mxu0 0
      %1236 = vmatpush1.bf16.msra.mxu0 0
      %1237 = vmatprep.subr.bf16.mxu0 0
      %1238 = vmatpush1.bf16.msra.mxu0 0
      %1239 = vmatprep.subr.bf16.mxu0 0
      %1240 = vmatpush1.bf16.msra.mxu0 0
      %1241 = vmatprep.subr.bf16.mxu0 0
      %1242 = vmatpush1.bf16.msra.mxu0 0
      %1243 = vmatprep.subr.bf16.mxu0 %v1138
      %1244 = vmatpush1.bf16.msra.mxu0 %v1137
      %1245 = vmatprep.subr.bf16.mxu0 %v1133
      %1246 = vmatpush1.bf16.msra.mxu0 %v1132
      %1247 = vmatprep.subr.bf16.mxu0 0
      %1248 = vmatpush2.bf16.msra.mxu0 0
      %1249 = vmatprep.subr.bf16.mxu0 0
      %1250 = vmatpush2.bf16.msra.mxu0 0
      %1251 = vmatprep.subr.bf16.mxu0 0
      %1252 = vmatpush2.bf16.msra.mxu0 0
      %1253 = vmatprep.subr.bf16.mxu0 0
      %1254 = vmatpush2.bf16.msra.mxu0 0
      %1255 = vmatprep.subr.bf16.mxu0 0
      %1256 = vmatpush2.bf16.msra.mxu0 0
      %1257 = vmatprep.subr.bf16.mxu0 0
      %1258 = vmatpush2.bf16.msra.mxu0 0
      %1259 = vmatprep.subr.bf16.mxu0 0
      %1260 = vmatpush2.bf16.msra.mxu0 0
      %1261 = vmatprep.subr.bf16.mxu0 0
      %1262 = vmatpush2.bf16.msra.mxu0 0
      %1263 = vmatprep.mubr.bf16.mxu0 0
      %1264 = vmatmul.mubr.bf16.gmra.mxu0 %v1220
      %v1265 = vpop.f32.mrf.mxu0
      %v1266 = vadd.f32 %v1161, %v1265
      %v1267 = vpop.f32.mrf.mxu0
      %v1268 = vadd.f32 %v1161, %v1267
      %v1269 = vpop.f32.mrf.mxu0
      %v1270 = vadd.f32 %v1166, %v1269
      %v1271 = vpop.f32.mrf.mxu0
      %v1272 = vadd.f32 %v1166, %v1271
      %1273 = vmatprep.mubr.bf16.mxu0 0
      %1274 = vmatmul.mubr.bf16.gmra.mxu0 %v1223
      %v1275 = vpop.f32.mrf.mxu0
      %v1276 = vadd.f32 %v1171, %v1275
      %v1277 = vpop.f32.mrf.mxu0
      %v1278 = vadd.f32 %v1171, %v1277
      %v1279 = vpop.f32.mrf.mxu0
      %v1280 = vadd.f32 %v1176, %v1279
      %v1281 = vpop.f32.mrf.mxu0
      %v1282 = vadd.f32 %v1176, %v1281
      %1283 = vmatprep.mubr.bf16.mxu0 0
      %1284 = vmatmul.mubr.bf16.gmra.mxu0 %v1226
      %v1285 = vpop.f32.mrf.mxu0
      %v1286 = vadd.f32 %v1181, %v1285
      %v1287 = vpop.f32.mrf.mxu0
      %v1288 = vadd.f32 %v1181, %v1287
      %v1289 = vpop.f32.mrf.mxu0
      %v1290 = vadd.f32 %v1186, %v1289
      %v1291 = vpop.f32.mrf.mxu0
      %v1292 = vadd.f32 %v1186, %v1291
      %1293 = vmatprep.mubr.bf16.mxu0 0
      %1294 = vmatmul.mubr.bf16.gmra.mxu0 %v1229
      %v1295 = vpop.f32.mrf.mxu0
      %v1296 = vadd.f32 %v1191, %v1295
      %v1297 = vpop.f32.mrf.mxu0
      %v1298 = vadd.f32 %v1191, %v1297
      %v1299 = vpop.f32.mrf.mxu0
      %v1300 = vadd.f32 %v1196, %v1299
      %v1301 = vpop.f32.mrf.mxu0
      %v1302 = vadd.f32 %v1196, %v1301
      %1303 = vdwg.mxu0
      %1304 = vmatprep.subr.bf16.mxu0 0
      %1305 = vmatpush1.bf16.msra.mxu0 0
      %1306 = vmatprep.subr.bf16.mxu0 0
      %1307 = vmatpush1.bf16.msra.mxu0 0
      %1308 = vmatprep.subr.bf16.mxu0 0
      %1309 = vmatpush1.bf16.msra.mxu0 0
      %1310 = vmatprep.subr.bf16.mxu0 0
      %1311 = vmatpush1.bf16.msra.mxu0 0
      %1312 = vmatprep.subr.bf16.mxu0 0
      %1313 = vmatpush1.bf16.msra.mxu0 0
      %1314 = vmatprep.subr.bf16.mxu0 0
      %1315 = vmatpush1.bf16.msra.mxu0 0
      %1316 = vmatprep.subr.bf16.mxu0 %v1140
      %1317 = vmatpush1.bf16.msra.mxu0 %v1139
      %1318 = vmatprep.subr.bf16.mxu0 %v1135
      %1319 = vmatpush1.bf16.msra.mxu0 %v1134
      %1320 = vmatprep.subr.bf16.mxu0 0
      %1321 = vmatpush2.bf16.msra.mxu0 0
      %1322 = vmatprep.subr.bf16.mxu0 0
      %1323 = vmatpush2.bf16.msra.mxu0 0
      %1324 = vmatprep.subr.bf16.mxu0 0
      %1325 = vmatpush2.bf16.msra.mxu0 0
      %1326 = vmatprep.subr.bf16.mxu0 0
      %1327 = vmatpush2.bf16.msra.mxu0 0
      %1328 = vmatprep.subr.bf16.mxu0 0
      %1329 = vmatpush2.bf16.msra.mxu0 0
      %1330 = vmatprep.subr.bf16.mxu0 0
      %1331 = vmatpush2.bf16.msra.mxu0 0
      %1332 = vmatprep.subr.bf16.mxu0 0
      %1333 = vmatpush2.bf16.msra.mxu0 0
      %1334 = vmatprep.subr.bf16.mxu0 0
      %1335 = vmatpush2.bf16.msra.mxu0 0
      %1336 = vmatprep.mubr.bf16.mxu0 0
      %1337 = vmatmul.mubr.bf16.gmra.mxu0 %v1220
      %v1338 = vpop.f32.mrf.mxu0
      %v1339 = vadd.f32 %v1161, %v1338
      %v1340 = vpop.f32.mrf.mxu0
      %v1341 = vadd.f32 %v1161, %v1340
      %v1342 = vpop.f32.mrf.mxu0
      %v1343 = vadd.f32 %v1166, %v1342
      %v1344 = vpop.f32.mrf.mxu0
      %v1345 = vadd.f32 %v1166, %v1344
      %1346 = vmatprep.mubr.bf16.mxu0 0
      %1347 = vmatmul.mubr.bf16.gmra.mxu0 %v1223
      %v1348 = vpop.f32.mrf.mxu0
      %v1349 = vadd.f32 %v1171, %v1348
      %v1350 = vpop.f32.mrf.mxu0
      %v1351 = vadd.f32 %v1171, %v1350
      %v1352 = vpop.f32.mrf.mxu0
      %v1353 = vadd.f32 %v1176, %v1352
      %v1354 = vpop.f32.mrf.mxu0
      %v1355 = vadd.f32 %v1176, %v1354
      %1356 = vmatprep.mubr.bf16.mxu0 0
      %1357 = vmatmul.mubr.bf16.gmra.mxu0 %v1226
      %v1358 = vpop.f32.mrf.mxu0
      %v1359 = vadd.f32 %v1181, %v1358
      %v1360 = vpop.f32.mrf.mxu0
      %v1361 = vadd.f32 %v1181, %v1360
      %v1362 = vpop.f32.mrf.mxu0
      %v1363 = vadd.f32 %v1186, %v1362
      %v1364 = vpop.f32.mrf.mxu0
      %v1365 = vadd.f32 %v1186, %v1364
      %1366 = vmatprep.mubr.bf16.mxu0 0
      %1367 = vmatmul.mubr.bf16.gmra.mxu0 %v1229
      %v1368 = vpop.f32.mrf.mxu0
      %v1369 = vadd.f32 %v1191, %v1368
      %v1370 = vpop.f32.mrf.mxu0
      %v1371 = vadd.f32 %v1191, %v1370
      %v1372 = vpop.f32.mrf.mxu0
      %v1373 = vadd.f32 %v1196, %v1372
      %v1374 = vpop.f32.mrf.mxu0
      %v1375 = vadd.f32 %v1196, %v1374
      %1376 = vdwg.mxu0
      %1377 = vmatprep.subr.bf16.mxu0 0
      %1378 = vmatpush1.bf16.msra.mxu0 0
      %1379 = vmatprep.subr.bf16.mxu0 0
      %1380 = vmatpush1.bf16.msra.mxu0 0
      %1381 = vmatprep.subr.bf16.mxu0 0
      %1382 = vmatpush1.bf16.msra.mxu0 0
      %1383 = vmatprep.subr.bf16.mxu0 0
      %1384 = vmatpush1.bf16.msra.mxu0 0
      %1385 = vmatprep.subr.bf16.mxu0 0
      %1386 = vmatpush1.bf16.msra.mxu0 0
      %1387 = vmatprep.subr.bf16.mxu0 0
      %1388 = vmatpush1.bf16.msra.mxu0 0
      %1389 = vmatprep.subr.bf16.mxu0 0
      %1390 = vmatpush1.bf16.msra.mxu0 %v1141
      %1391 = vmatprep.subr.bf16.mxu0 0
      %1392 = vmatpush1.bf16.msra.mxu0 %v1136
      %1393 = vmatprep.subr.bf16.mxu0 0
      %1394 = vmatpush2.bf16.msra.mxu0 0
      %1395 = vmatprep.subr.bf16.mxu0 0
      %1396 = vmatpush2.bf16.msra.mxu0 0
      %1397 = vmatprep.subr.bf16.mxu0 0
      %1398 = vmatpush2.bf16.msra.mxu0 0
      %1399 = vmatprep.subr.bf16.mxu0 0
      %1400 = vmatpush2.bf16.msra.mxu0 0
      %1401 = vmatprep.subr.bf16.mxu0 0
      %1402 = vmatpush2.bf16.msra.mxu0 0
      %1403 = vmatprep.subr.bf16.mxu0 0
      %1404 = vmatpush2.bf16.msra.mxu0 0
      %1405 = vmatprep.subr.bf16.mxu0 0
      %1406 = vmatpush2.bf16.msra.mxu0 0
      %1407 = vmatprep.subr.bf16.mxu0 0
      %1408 = vmatpush2.bf16.msra.mxu0 0
      %1409 = vmatprep.mubr.bf16.mxu0 0
      %1410 = vmatmul.mubr.bf16.gmra.mxu0 %v1220
      %v1411 = vpop.f32.mrf.mxu0
      %v1412 = vadd.f32 %v1161, %v1411
      %v1413 = vpop.f32.mrf.mxu0
      %v1414 = vpop.f32.mrf.mxu0
      %v1415 = vadd.f32 %v1166, %v1414
      %v1416 = vpop.f32.mrf.mxu0
      %1417 = vmatprep.mubr.bf16.mxu0 0
      %1418 = vmatmul.mubr.bf16.gmra.mxu0 %v1223
      %v1419 = vpop.f32.mrf.mxu0
      %v1420 = vadd.f32 %v1171, %v1419
      %v1421 = vpop.f32.mrf.mxu0
      %v1422 = vpop.f32.mrf.mxu0
      %v1423 = vadd.f32 %v1176, %v1422
      %v1424 = vpop.f32.mrf.mxu0
      %1425 = vmatprep.mubr.bf16.mxu0 0
      %1426 = vmatmul.mubr.bf16.gmra.mxu0 %v1226
      %v1427 = vpop.f32.mrf.mxu0
      %v1428 = vadd.f32 %v1181, %v1427
      %v1429 = vpop.f32.mrf.mxu0
      %v1430 = vpop.f32.mrf.mxu0
      %v1431 = vadd.f32 %v1186, %v1430
      %v1432 = vpop.f32.mrf.mxu0
      %1433 = vmatprep.mubr.bf16.mxu0 0
      %1434 = vmatmul.mubr.bf16.gmra.mxu0 %v1229
      %v1435 = vpop.f32.mrf.mxu0
      %v1436 = vadd.f32 %v1191, %v1435
      %v1437 = vpop.f32.mrf.mxu0
      %v1438 = vpop.f32.mrf.mxu0
      %v1439 = vadd.f32 %v1196, %v1438
      %v1440 = vpop.f32.mrf.mxu0
      %1441 = vdwg.mxu0
      %v1442 = vmax.f32 %v1266, 0.0
      %v1443 = vmax.f32 %v1268, 0.0
      %v1444 = vmax.f32 %v1339, 0.0
      %v1445 = vmax.f32 %v1341, 0.0
      %v1446 = vmax.f32 %v1412, 0.0
      %v1447 = vmax.f32 %v1270, 0.0
      %v1448 = vmax.f32 %v1272, 0.0
      %v1449 = vmax.f32 %v1343, 0.0
      %v1450 = vmax.f32 %v1345, 0.0
      %v1451 = vmax.f32 %v1415, 0.0
      %v1452 = vmax.f32 %v1276, 0.0
      %v1453 = vmax.f32 %v1278, 0.0
      %v1454 = vmax.f32 %v1349, 0.0
      %v1455 = vmax.f32 %v1351, 0.0
      %v1456 = vmax.f32 %v1420, 0.0
      %v1457 = vmax.f32 %v1280, 0.0
      %v1458 = vmax.f32 %v1282, 0.0
      %v1459 = vmax.f32 %v1353, 0.0
      %v1460 = vmax.f32 %v1355, 0.0
      %v1461 = vmax.f32 %v1423, 0.0
      %v1462 = vmax.f32 %v1286, 0.0
      %v1463 = vmax.f32 %v1288, 0.0
      %v1464 = vmax.f32 %v1359, 0.0
      %v1465 = vmax.f32 %v1361, 0.0
      %v1466 = vmax.f32 %v1428, 0.0
      %v1467 = vmax.f32 %v1290, 0.0
      %v1468 = vmax.f32 %v1292, 0.0
      %v1469 = vmax.f32 %v1363, 0.0
      %v1470 = vmax.f32 %v1365, 0.0
      %v1471 = vmax.f32 %v1431, 0.0
      %v1472 = vmax.f32 %v1296, 0.0
      %v1473 = vmax.f32 %v1298, 0.0
      %v1474 = vmax.f32 %v1369, 0.0
      %v1475 = vmax.f32 %v1371, 0.0
      %v1476 = vmax.f32 %v1436, 0.0
      %v1477 = vmax.f32 %v1300, 0.0
      %v1478 = vmax.f32 %v1302, 0.0
      %v1479 = vmax.f32 %v1373, 0.0
      %v1480 = vmax.f32 %v1375, 0.0
      %v1481 = vmax.f32 %v1439, 0.0
      %v1482 = vpack.c.bf16 %v1447, %v1442
      %v1483 = vpack.c.bf16 %v1448, %v1443
      %v1484 = vpack.c.bf16 %v1449, %v1444
      %v1485 = vpack.c.bf16 %v1450, %v1445
      %v1486 = vpack.c.bf16 %v1451, %v1446
      %v1487 = vpack.c.bf16 %v1457, %v1452
      %v1488 = vpack.c.bf16 %v1458, %v1453
      %v1489 = vpack.c.bf16 %v1459, %v1454
      %v1490 = vpack.c.bf16 %v1460, %v1455
      %v1491 = vpack.c.bf16 %v1461, %v1456
      %v1492 = vpack.c.bf16 %v1467, %v1462
      %v1493 = vpack.c.bf16 %v1468, %v1463
      %v1494 = vpack.c.bf16 %v1469, %v1464
      %v1495 = vpack.c.bf16 %v1470, %v1465
      %v1496 = vpack.c.bf16 %v1471, %v1466
      %v1497 = vpack.c.bf16 %v1477, %v1472
      %v1498 = vpack.c.bf16 %v1478, %v1473
      %v1499 = vpack.c.bf16 %v1479, %v1474
      %v1500 = vpack.c.bf16 %v1480, %v1475
      %v1501 = vpack.c.bf16 %v1481, %v1476
      %v1502 = vld [vmem:[%s7] sm:$0xf]
      %v1503 = vld [vmem:[%s7 + $0x4] sm:$0xf]
      %v1504 = vld [vmem:[%s7 + $0x8] sm:$0xf]
      %v1505 = vld [vmem:[%s7 + $0xc] sm:$0xf]
      %v1506 = vld [vmem:[%s8] sm:$0xff]
      %v1507 = vld [vmem:[%s8 + $0x8] sm:$0xff]
      %v1508 = vld [vmem:[%s8 + $0x10] sm:$0xff]
      %v1509 = vld [vmem:[%s8 + $0x18] sm:$0xff]
      %1511 = vset.pattern.permute.xlu0 0
      %1512 = vperm.xlu0 %1511, %v1506
      %v1513 = vpop.permute.xlu0 %1512
      %1516 = vset.pattern.permute.xlu0 0
      %1517 = vperm.xlu0 %1516, %v1507
      %v1518 = vpop.permute.xlu0 %1517
      %1521 = vset.pattern.permute.xlu0 0
      %1522 = vperm.xlu0 %1521, %v1508
      %v1523 = vpop.permute.xlu0 %1522
      %1526 = vset.pattern.permute.xlu0 0
      %1527 = vperm.xlu0 %1526, %v1509
      %v1528 = vpop.permute.xlu0 %1527
      %v1534 = vunpack.c.l.b16 %v1502
      %v1535 = vunpack.c.l.b16 %v1503
      %v1536 = vunpack.c.l.b16 %v1504
      %v1537 = vunpack.c.l.b16 %v1505
      %v1538 = vpack.c.b16 %v1535, %v1534
      %v1539 = vpack.c.b16 %v1537, %v1536
      %v1541 = vsel %vm950, %v1538, 0
      %v1544 = vsel %vm950, %v1539, 0
      %1546 = vmatprep.subr.bf16.mxu0 0
      %1547 = vmatpush1.bf16.msra.mxu0 0
      %1548 = vmatprep.subr.bf16.mxu0 0
      %1549 = vmatpush1.bf16.msra.mxu0 0
      %1550 = vmatprep.subr.bf16.mxu0 0
      %1551 = vmatpush1.bf16.msra.mxu0 0
      %1552 = vmatprep.subr.bf16.mxu0 0
      %1553 = vmatpush1.bf16.msra.mxu0 0
      %1554 = vmatprep.subr.bf16.mxu0 %v1498
      %1555 = vmatpush1.bf16.msra.mxu0 %v1497
      %1556 = vmatprep.subr.bf16.mxu0 %v1493
      %1557 = vmatpush1.bf16.msra.mxu0 %v1492
      %1558 = vmatprep.subr.bf16.mxu0 %v1488
      %1559 = vmatpush1.bf16.msra.mxu0 %v1487
      %1560 = vmatprep.subr.bf16.mxu0 %v1483
      %1561 = vmatpush1.bf16.msra.mxu0 %v1482
      %1562 = vmatprep.subr.bf16.mxu0 0
      %1563 = vmatpush2.bf16.msra.mxu0 0
      %1564 = vmatprep.subr.bf16.mxu0 0
      %1565 = vmatpush2.bf16.msra.mxu0 0
      %1566 = vmatprep.subr.bf16.mxu0 0
      %1567 = vmatpush2.bf16.msra.mxu0 0
      %1568 = vmatprep.subr.bf16.mxu0 0
      %1569 = vmatpush2.bf16.msra.mxu0 0
      %1570 = vmatprep.subr.bf16.mxu0 0
      %1571 = vmatpush2.bf16.msra.mxu0 0
      %1572 = vmatprep.subr.bf16.mxu0 0
      %1573 = vmatpush2.bf16.msra.mxu0 0
      %1574 = vmatprep.subr.bf16.mxu0 0
      %1575 = vmatpush2.bf16.msra.mxu0 0
      %1576 = vmatprep.subr.bf16.mxu0 0
      %1577 = vmatpush2.bf16.msra.mxu0 0
      %1578 = vmatprep.mubr.bf16.mxu0 0
      %1579 = vmatmul.mubr.bf16.gmra.mxu0 %v1541
      %v1580 = vpop.f32.mrf.mxu0
      %v1581 = vadd.f32 %v1513, %v1580
      %v1582 = vpop.f32.mrf.mxu0
      %v1583 = vadd.f32 %v1513, %v1582
      %v1584 = vpop.f32.mrf.mxu0
      %v1585 = vadd.f32 %v1518, %v1584
      %v1586 = vpop.f32.mrf.mxu0
      %v1587 = vadd.f32 %v1518, %v1586
      %1588 = vmatprep.mubr.bf16.mxu0 0
      %1589 = vmatmul.mubr.bf16.gmra.mxu0 %v1544
      %v1590 = vpop.f32.mrf.mxu0
      %v1591 = vadd.f32 %v1523, %v1590
      %v1592 = vpop.f32.mrf.mxu0
      %v1593 = vadd.f32 %v1523, %v1592
      %v1594 = vpop.f32.mrf.mxu0
      %v1595 = vadd.f32 %v1528, %v1594
      %v1596 = vpop.f32.mrf.mxu0
      %v1597 = vadd.f32 %v1528, %v1596
      %1598 = vdwg.mxu0
      %1599 = vmatprep.subr.bf16.mxu0 0
      %1600 = vmatpush1.bf16.msra.mxu0 0
      %1601 = vmatprep.subr.bf16.mxu0 0
      %1602 = vmatpush1.bf16.msra.mxu0 0
      %1603 = vmatprep.subr.bf16.mxu0 0
      %1604 = vmatpush1.bf16.msra.mxu0 0
      %1605 = vmatprep.subr.bf16.mxu0 0
      %1606 = vmatpush1.bf16.msra.mxu0 0
      %1607 = vmatprep.subr.bf16.mxu0 %v1500
      %1608 = vmatpush1.bf16.msra.mxu0 %v1499
      %1609 = vmatprep.subr.bf16.mxu0 %v1495
      %1610 = vmatpush1.bf16.msra.mxu0 %v1494
      %1611 = vmatprep.subr.bf16.mxu0 %v1490
      %1612 = vmatpush1.bf16.msra.mxu0 %v1489
      %1613 = vmatprep.subr.bf16.mxu0 %v1485
      %1614 = vmatpush1.bf16.msra.mxu0 %v1484
      %1615 = vmatprep.subr.bf16.mxu0 0
      %1616 = vmatpush2.bf16.msra.mxu0 0
      %1617 = vmatprep.subr.bf16.mxu0 0
      %1618 = vmatpush2.bf16.msra.mxu0 0
      %1619 = vmatprep.subr.bf16.mxu0 0
      %1620 = vmatpush2.bf16.msra.mxu0 0
      %1621 = vmatprep.subr.bf16.mxu0 0
      %1622 = vmatpush2.bf16.msra.mxu0 0
      %1623 = vmatprep.subr.bf16.mxu0 0
      %1624 = vmatpush2.bf16.msra.mxu0 0
      %1625 = vmatprep.subr.bf16.mxu0 0
      %1626 = vmatpush2.bf16.msra.mxu0 0
      %1627 = vmatprep.subr.bf16.mxu0 0
      %1628 = vmatpush2.bf16.msra.mxu0 0
      %1629 = vmatprep.subr.bf16.mxu0 0
      %1630 = vmatpush2.bf16.msra.mxu0 0
      %1631 = vmatprep.mubr.bf16.mxu0 0
      %1632 = vmatmul.mubr.bf16.gmra.mxu0 %v1541
      %v1633 = vpop.f32.mrf.mxu0
      %v1634 = vadd.f32 %v1513, %v1633
      %v1635 = vpop.f32.mrf.mxu0
      %v1636 = vadd.f32 %v1513, %v1635
      %v1637 = vpop.f32.mrf.mxu0
      %v1638 = vadd.f32 %v1518, %v1637
      %v1639 = vpop.f32.mrf.mxu0
      %v1640 = vadd.f32 %v1518, %v1639
      %1641 = vmatprep.mubr.bf16.mxu0 0
      %1642 = vmatmul.mubr.bf16.gmra.mxu0 %v1544
      %v1643 = vpop.f32.mrf.mxu0
      %v1644 = vadd.f32 %v1523, %v1643
      %v1645 = vpop.f32.mrf.mxu0
      %v1646 = vadd.f32 %v1523, %v1645
      %v1647 = vpop.f32.mrf.mxu0
      %v1648 = vadd.f32 %v1528, %v1647
      %v1649 = vpop.f32.mrf.mxu0
      %v1650 = vadd.f32 %v1528, %v1649
      %1651 = vdwg.mxu0
      %1652 = vmatprep.subr.bf16.mxu0 0
      %1653 = vmatpush1.bf16.msra.mxu0 0
      %1654 = vmatprep.subr.bf16.mxu0 0
      %1655 = vmatpush1.bf16.msra.mxu0 0
      %1656 = vmatprep.subr.bf16.mxu0 0
      %1657 = vmatpush1.bf16.msra.mxu0 0
      %1658 = vmatprep.subr.bf16.mxu0 0
      %1659 = vmatpush1.bf16.msra.mxu0 0
      %1660 = vmatprep.subr.bf16.mxu0 0
      %1661 = vmatpush1.bf16.msra.mxu0 %v1501
      %1662 = vmatprep.subr.bf16.mxu0 0
      %1663 = vmatpush1.bf16.msra.mxu0 %v1496
      %1664 = vmatprep.subr.bf16.mxu0 0
      %1665 = vmatpush1.bf16.msra.mxu0 %v1491
      %1666 = vmatprep.subr.bf16.mxu0 0
      %1667 = vmatpush1.bf16.msra.mxu0 %v1486
      %1668 = vmatprep.subr.bf16.mxu0 0
      %1669 = vmatpush2.bf16.msra.mxu0 0
      %1670 = vmatprep.subr.bf16.mxu0 0
      %1671 = vmatpush2.bf16.msra.mxu0 0
      %1672 = vmatprep.subr.bf16.mxu0 0
      %1673 = vmatpush2.bf16.msra.mxu0 0
      %1674 = vmatprep.subr.bf16.mxu0 0
      %1675 = vmatpush2.bf16.msra.mxu0 0
      %1676 = vmatprep.subr.bf16.mxu0 0
      %1677 = vmatpush2.bf16.msra.mxu0 0
      %1678 = vmatprep.subr.bf16.mxu0 0
      %1679 = vmatpush2.bf16.msra.mxu0 0
      %1680 = vmatprep.subr.bf16.mxu0 0
      %1681 = vmatpush2.bf16.msra.mxu0 0
      %1682 = vmatprep.subr.bf16.mxu0 0
      %1683 = vmatpush2.bf16.msra.mxu0 0
      %1684 = vmatprep.mubr.bf16.mxu0 0
      %1685 = vmatmul.mubr.bf16.gmra.mxu0 %v1541
      %v1686 = vpop.f32.mrf.mxu0
      %v1687 = vadd.f32 %v1513, %v1686
      %v1688 = vpop.f32.mrf.mxu0
      %v1689 = vpop.f32.mrf.mxu0
      %v1690 = vadd.f32 %v1518, %v1689
      %v1691 = vpop.f32.mrf.mxu0
      %1692 = vmatprep.mubr.bf16.mxu0 0
      %1693 = vmatmul.mubr.bf16.gmra.mxu0 %v1544
      %v1694 = vpop.f32.mrf.mxu0
      %v1695 = vadd.f32 %v1523, %v1694
      %v1696 = vpop.f32.mrf.mxu0
      %v1697 = vpop.f32.mrf.mxu0
      %v1698 = vadd.f32 %v1528, %v1697
      %v1699 = vpop.f32.mrf.mxu0
      %1700 = vdwg.mxu0
      %v1701 = vmax.f32 %v1581, 0.0
      %v1702 = vmax.f32 %v1583, 0.0
      %v1703 = vmax.f32 %v1634, 0.0
      %v1704 = vmax.f32 %v1636, 0.0
      %v1705 = vmax.f32 %v1687, 0.0
      %v1706 = vmax.f32 %v1585, 0.0
      %v1707 = vmax.f32 %v1587, 0.0
      %v1708 = vmax.f32 %v1638, 0.0
      %v1709 = vmax.f32 %v1640, 0.0
      %v1710 = vmax.f32 %v1690, 0.0
      %v1711 = vmax.f32 %v1591, 0.0
      %v1712 = vmax.f32 %v1593, 0.0
      %v1713 = vmax.f32 %v1644, 0.0
      %v1714 = vmax.f32 %v1646, 0.0
      %v1715 = vmax.f32 %v1695, 0.0
      %v1716 = vmax.f32 %v1595, 0.0
      %v1717 = vmax.f32 %v1597, 0.0
      %v1718 = vmax.f32 %v1648, 0.0
      %v1719 = vmax.f32 %v1650, 0.0
      %v1720 = vmax.f32 %v1698, 0.0
      %v1721 = vpack.c.bf16 %v1706, %v1701
      %v1722 = vpack.c.bf16 %v1707, %v1702
      %v1723 = vpack.c.bf16 %v1708, %v1703
      %v1724 = vpack.c.bf16 %v1709, %v1704
      %v1725 = vpack.c.bf16 %v1710, %v1705
      %v1726 = vpack.c.bf16 %v1716, %v1711
      %v1727 = vpack.c.bf16 %v1717, %v1712
      %v1728 = vpack.c.bf16 %v1718, %v1713
      %v1729 = vpack.c.bf16 %v1719, %v1714
      %v1730 = vpack.c.bf16 %v1720, %v1715
      %v1731 = vld [vmem:[%s9] sm:$0x3]
      %v1732 = vld [vmem:[%s10] sm:$0x7]
      %1734 = vset.pattern.permute.xlu0 0
      %1735 = vperm.xlu0 %1734, %v1732
      %v1736 = vpop.permute.xlu0 %1735
      %v1739 = vsel %vm1218, %v1731, 0
      %1741 = vmatprep.subr.bf16.mxu0 0
      %1742 = vmatpush1.bf16.msra.mxu0 0
      %1743 = vmatprep.subr.bf16.mxu0 0
      %1744 = vmatpush1.bf16.msra.mxu0 0
      %1745 = vmatprep.subr.bf16.mxu0 0
      %1746 = vmatpush1.bf16.msra.mxu0 0
      %1747 = vmatprep.subr.bf16.mxu0 0
      %1748 = vmatpush1.bf16.msra.mxu0 0
      %1749 = vmatprep.subr.bf16.mxu0 0
      %1750 = vmatpush1.bf16.msra.mxu0 0
      %1751 = vmatprep.subr.bf16.mxu0 0
      %1752 = vmatpush1.bf16.msra.mxu0 0
      %1753 = vmatprep.subr.bf16.mxu0 %v1727
      %1754 = vmatpush1.bf16.msra.mxu0 %v1726
      %1755 = vmatprep.subr.bf16.mxu0 %v1722
      %1756 = vmatpush1.bf16.msra.mxu0 %v1721
      %1757 = vmatprep.subr.bf16.mxu0 0
      %1758 = vmatpush2.bf16.msra.mxu0 0
      %1759 = vmatprep.subr.bf16.mxu0 0
      %1760 = vmatpush2.bf16.msra.mxu0 0
      %1761 = vmatprep.subr.bf16.mxu0 0
      %1762 = vmatpush2.bf16.msra.mxu0 0
      %1763 = vmatprep.subr.bf16.mxu0 0
      %1764 = vmatpush2.bf16.msra.mxu0 0
      %1765 = vmatprep.subr.bf16.mxu0 0
      %1766 = vmatpush2.bf16.msra.mxu0 0
      %1767 = vmatprep.subr.bf16.mxu0 0
      %1768 = vmatpush2.bf16.msra.mxu0 0
      %1769 = vmatprep.subr.bf16.mxu0 0
      %1770 = vmatpush2.bf16.msra.mxu0 0
      %1771 = vmatprep.subr.bf16.mxu0 0
      %1772 = vmatpush2.bf16.msra.mxu0 0
      %1773 = vmatprep.mubr.bf16.mxu0 0
      %1774 = vmatmul.mubr.bf16.gmra.mxu0 %v1739
      %v1775 = vpop.f32.mrf.mxu0
      %v1776 = vadd.f32 %v1736, %v1775
      %v1777 = vpop.f32.mrf.mxu0
      %v1778 = vadd.f32 %v1736, %v1777
      %v1779 = vpop.f32.mrf.mxu0
      %v1780 = vpop.f32.mrf.mxu0
      %1781 = vdwg.mxu0
      %1782 = vmatprep.subr.bf16.mxu0 0
      %1783 = vmatpush1.bf16.msra.mxu0 0
      %1784 = vmatprep.subr.bf16.mxu0 0
      %1785 = vmatpush1.bf16.msra.mxu0 0
      %1786 = vmatprep.subr.bf16.mxu0 0
      %1787 = vmatpush1.bf16.msra.mxu0 0
      %1788 = vmatprep.subr.bf16.mxu0 0
      %1789 = vmatpush1.bf16.msra.mxu0 0
      %1790 = vmatprep.subr.bf16.mxu0 0
      %1791 = vmatpush1.bf16.msra.mxu0 0
      %1792 = vmatprep.subr.bf16.mxu0 0
      %1793 = vmatpush1.bf16.msra.mxu0 0
      %1794 = vmatprep.subr.bf16.mxu0 %v1729
      %1795 = vmatpush1.bf16.msra.mxu0 %v1728
      %1796 = vmatprep.subr.bf16.mxu0 %v1724
      %1797 = vmatpush1.bf16.msra.mxu0 %v1723
      %1798 = vmatprep.subr.bf16.mxu0 0
      %1799 = vmatpush2.bf16.msra.mxu0 0
      %1800 = vmatprep.subr.bf16.mxu0 0
      %1801 = vmatpush2.bf16.msra.mxu0 0
      %1802 = vmatprep.subr.bf16.mxu0 0
      %1803 = vmatpush2.bf16.msra.mxu0 0
      %1804 = vmatprep.subr.bf16.mxu0 0
      %1805 = vmatpush2.bf16.msra.mxu0 0
      %1806 = vmatprep.subr.bf16.mxu0 0
      %1807 = vmatpush2.bf16.msra.mxu0 0
      %1808 = vmatprep.subr.bf16.mxu0 0
      %1809 = vmatpush2.bf16.msra.mxu0 0
      %1810 = vmatprep.subr.bf16.mxu0 0
      %1811 = vmatpush2.bf16.msra.mxu0 0
      %1812 = vmatprep.subr.bf16.mxu0 0
      %1813 = vmatpush2.bf16.msra.mxu0 0
      %1814 = vmatprep.mubr.bf16.mxu0 0
      %1815 = vmatmul.mubr.bf16.gmra.mxu0 %v1739
      %v1816 = vpop.f32.mrf.mxu0
      %v1817 = vadd.f32 %v1736, %v1816
      %v1818 = vpop.f32.mrf.mxu0
      %v1819 = vadd.f32 %v1736, %v1818
      %v1820 = vpop.f32.mrf.mxu0
      %v1821 = vpop.f32.mrf.mxu0
      %1822 = vdwg.mxu0
      %1823 = vmatprep.subr.bf16.mxu0 0
      %1824 = vmatpush1.bf16.msra.mxu0 0
      %1825 = vmatprep.subr.bf16.mxu0 0
      %1826 = vmatpush1.bf16.msra.mxu0 0
      %1827 = vmatprep.subr.bf16.mxu0 0
      %1828 = vmatpush1.bf16.msra.mxu0 0
      %1829 = vmatprep.subr.bf16.mxu0 0
      %1830 = vmatpush1.bf16.msra.mxu0 0
      %1831 = vmatprep.subr.bf16.mxu0 0
      %1832 = vmatpush1.bf16.msra.mxu0 0
      %1833 = vmatprep.subr.bf16.mxu0 0
      %1834 = vmatpush1.bf16.msra.mxu0 0
      %1835 = vmatprep.subr.bf16.mxu0 0
      %1836 = vmatpush1.bf16.msra.mxu0 %v1730
      %1837 = vmatprep.subr.bf16.mxu0 0
      %1838 = vmatpush1.bf16.msra.mxu0 %v1725
      %1839 = vmatprep.subr.bf16.mxu0 0
      %1840 = vmatpush2.bf16.msra.mxu0 0
      %1841 = vmatprep.subr.bf16.mxu0 0
      %1842 = vmatpush2.bf16.msra.mxu0 0
      %1843 = vmatprep.subr.bf16.mxu0 0
      %1844 = vmatpush2.bf16.msra.mxu0 0
      %1845 = vmatprep.subr.bf16.mxu0 0
      %1846 = vmatpush2.bf16.msra.mxu0 0
      %1847 = vmatprep.subr.bf16.mxu0 0
      %1848 = vmatpush2.bf16.msra.mxu0 0
      %1849 = vmatprep.subr.bf16.mxu0 0
      %1850 = vmatpush2.bf16.msra.mxu0 0
      %1851 = vmatprep.subr.bf16.mxu0 0
      %1852 = vmatpush2.bf16.msra.mxu0 0
      %1853 = vmatprep.subr.bf16.mxu0 0
      %1854 = vmatpush2.bf16.msra.mxu0 0
      %1855 = vmatprep.mubr.bf16.mxu0 0
      %1856 = vmatmul.mubr.bf16.gmra.mxu0 %v1739
      %v1857 = vpop.f32.mrf.mxu0
      %v1858 = vadd.f32 %v1736, %v1857
      %v1859 = vpop.f32.mrf.mxu0
      %v1860 = vpop.f32.mrf.mxu0
      %v1861 = vpop.f32.mrf.mxu0
      %1862 = vdwg.mxu0
      %v1867 = vcombine.low %v1776, %v1778
      %v1868 = vcombine.low %v1817, %v1819
      %1871 = vst [vmem:[%s450] sm:$0x77] %v1867
      %1872 = vst [vmem:[%s450 + $0x8] sm:$0x77] %v1868
      %1873 = vst [vmem:[%s450 + $0x10] sm:$0x7] %v1858
      %s1874 = smul.u32 5, %s27
      %p1875 = scmp.lt.s32.totalorder %s26, 1
      %s1876 = scalar_select %p1875, %s26, 1
      %p1877 = scmp.lt.s32.totalorder %s1874, 4
      %s1878 = scalar_select %p1877, %s1874, 4
      %s1879 = smul.addr %s1876, 5
      %s1880 = sadd.s32 %s1878, %s1879
      %s1881 = smul.addr %s1880, 4
      %s1882 = scalar_lea.vmem %s11, %s1881
      // Predicated region
      $region65: #{fold_forward.1} parent=63 // pred_check
        %p1883 = pneg %p300
      $region66: #{fold_forward.1} parent=63 // pred_check_branch
        %1885 = sbr.rel (%p1883) target = $region68
      $region67: #{fold_forward.1} parent=63 // pred_region
        %s1886 = smul.u32 5, %s27
      $region68: #{fold_forward.1} parent=63 // pred_fallthru
        _
    $region64: #{fold_forward.1} parent=5 // pred_fallthru
      _
    %p1887 = scmp.le.s32.totalorder 2, %s17
    // Predicated region
    $region69: #{fold_forward.1} parent=5 // pred_check
      %p1888 = pneg %p1887
    $region70: #{fold_forward.1} parent=5 // pred_check_branch
      %1890 = sbr.rel (%p1888) target = $region72
    $region71: #{fold_forward.1} parent=5 // pred_region
      %s1891 = ssub.s32 %s17, 2
      // Predicated region
      $region73: #{fold_forward.1} parent=71 // pred_check
        %p1892 = pneg %p306
      $region74: #{fold_forward.1} parent=71 // pred_check_branch
        %1894 = sbr.rel (%p1892) target = $region76
      $region75: #{fold_forward.1} parent=71 // pred_region
        %s1895 = smul.u32 5, %s29
        %p1896 = scmp.lt.s32.totalorder %s28, 1
        %s1897 = scalar_select %p1896, %s28, 1
        %p1898 = scmp.lt.s32.totalorder %s1895, 4
        %s1899 = scalar_select %p1898, %s1895, 4
        %s1900 = smul.addr %s1897, 5
        %s1901 = sadd.s32 %s1899, %s1900
        %s1902 = smul.addr %s1901, 4
        %s1903 = scalar_lea.vmem %s11, %s1902
      $region76: #{fold_forward.1} parent=71 // pred_fallthru
        _
    $region72: #{fold_forward.1} parent=5 // pred_fallthru
      _
  $region6: #{fold_forward.1} parent=0 // loop_footer
    %s21 = sadd.s32 1, %s17
  $region7: #{fold_forward.1} parent=0 // loop_footer_branch
    %16 = sbr.rel target = $region3
  $region8: #{fold_forward.1} parent=0 // loop_exit
    _

</llo_original>
